<compile_context>
chip_gen: v7x
topology: tpu7x:2x2x1
jax: 0.10.0
libtpu: 0.0.40
codegen_flags: <defaults>
</compile_context>

<pallas_src>
import jax
import jax.numpy as jnp
from jax.experimental import pallas as pl
from jax.experimental.pallas import tpu as pltpu

IN_FEATURES = 28 * 28          # 784 (unpadded: full-array lane dim is legal)
HIDDEN = 512
OUT_FEATURES = 10
OUT_PAD = 128                  # lane-dense padded logits width
MAX_TB = 1024                  # row-tile cap (VMEM headroom vs v7x 32 MiB scoped default)


def mlp_kernel(x_ref, w1_ref, b1_ref, w2_ref, b2_ref, w3_ref, b3_ref, out_ref):
    # x_ref: (TB, 784) f32; w*: bf16 (in, out); b*: f32 (1, out); out_ref: (TB, 128) bf16
    x = x_ref[...].astype(jnp.bfloat16)        # in-kernel cast: no extra HBM pass

    h1 = jnp.dot(x, w1_ref[...], preferred_element_type=jnp.float32)   # f32 acc
    h1 = jnp.maximum(h1 + b1_ref[...], 0.0).astype(jnp.bfloat16)       # f32 epilogue

    h2 = jnp.dot(h1, w2_ref[...], preferred_element_type=jnp.float32)
    h2 = jnp.maximum(h2 + b2_ref[...], 0.0).astype(jnp.bfloat16)

    logits = jnp.dot(h2, w3_ref[...], preferred_element_type=jnp.float32) + b3_ref[...]
    out_ref[...] = logits.astype(out_ref.dtype)                         # lane-dense bf16 store


def _round_up(x, m):
    return ((x + m - 1) // m) * m


def _batch_tiling(B):
    """Pick (TB, B_pad). Only batch rows are ever padded; K is never padded."""
    if B % 32 != 0 or B < 64:
        if B <= 2048:
            # Tiny / ragged batch: one tile whose block equals the full array
            # dims (always layout-legal) -> no wrapper-side padding at all.
            return B, B
        B = _round_up(B, 32)                    # large ragged batch: pad a few rows
    # >= 2 tiles so the "parallel" batch axis shards across both v7x TensorCores;
    # an even tile count keeps the two cores balanced.
    n_tiles = _round_up(max(2, pl.cdiv(B, MAX_TB)), 2)
    TB = _round_up(pl.cdiv(B, n_tiles), 32)     # bf16 sublane packing + MXU-friendly
    return TB, _round_up(B, TB)


def neural_network_forward(x, params):
    """x: (B, 1, 28, 28), (B, 28, 28) or (B, 784). Returns logits (B, 10) f32."""
    w1, b1, w2, b2, w3, b3 = params
    B = x.shape[0]
    x_flat = x.reshape(B, -1)
    assert x_flat.shape[1] == IN_FEATURES

    TB, B_pad = _batch_tiling(B)
    n_tiles = B_pad // TB
    if B_pad != B:
        x_flat = jnp.pad(x_flat, ((0, B_pad - B), (0, 0)))

    resident = lambda shape: pl.BlockSpec(shape, lambda i: (0, 0))   # weights: fetched once, VMEM-resident
    streamed = lambda shape: pl.BlockSpec(shape, lambda i: (i, 0))   # activations: tiled over batch

    flops = 2 * B_pad * (IN_FEATURES * HIDDEN + HIDDEN * HIDDEN + HIDDEN * OUT_PAD)
    bytes_accessed = (
        x_flat.size * x_flat.dtype.itemsize
        + (w1.size + w2.size + w3.size) * 2
        + (b1.size + b2.size + b3.size) * 4
        + B_pad * OUT_PAD * 2
    )

    out = pl.pallas_call(
        mlp_kernel,
        out_shape=jax.ShapeDtypeStruct((B_pad, OUT_PAD), jnp.bfloat16),
        grid=(n_tiles,),
        in_specs=[
            streamed((TB, IN_FEATURES)),
            resident((IN_FEATURES, HIDDEN)),
            resident((1, HIDDEN)),
            resident((HIDDEN, HIDDEN)),
            resident((1, HIDDEN)),
            resident((HIDDEN, OUT_PAD)),
            resident((1, OUT_PAD)),
        ],
        out_specs=streamed((TB, OUT_PAD)),
        compiler_params=pltpu.CompilerParams(
            dimension_semantics=("parallel",),
        ),
        cost_estimate=pl.CostEstimate(
            flops=flops, transcendentals=0, bytes_accessed=bytes_accessed),
    )(x_flat, w1, b1, w2, b2, w3, b3)

    # TODO(synk): for repeated tiny-batch serving calls, prefetch/pin the
    # weights across calls (cross-call DMA future) instead of re-DMA-ing them
    # each invocation.
    return out[:B, :OUT_FEATURES].astype(jnp.float32)


def init_params(key):
    """PyTorch nn.Linear-style init; weights stored transposed (in, out);
    weights bf16 (half HBM traffic, 2x MXU rate), biases f32."""
    ks = jax.random.split(key, 6)

    def linear(kw, kb, fan_in, fan_out):
        bound = 1.0 / jnp.sqrt(fan_in)
        w = jax.random.uniform(kw, (fan_in, fan_out), jnp.float32, -bound, bound)
        b = jax.random.uniform(kb, (1, fan_out), jnp.float32, -bound, bound)
        return w, b

    w1, b1 = linear(ks[0], ks[1], IN_FEATURES, HIDDEN)
    w2, b2 = linear(ks[2], ks[3], HIDDEN, HIDDEN)
    w3, b3 = linear(ks[4], ks[5], HIDDEN, OUT_FEATURES)

    # Only the tiny output layer is padded (10 -> 128 cols, zeros sliced off in
    # the wrapper); w1 keeps its real 784 rows (no K padding).
    w3p = jnp.zeros((HIDDEN, OUT_PAD), jnp.float32).at[:, :OUT_FEATURES].set(w3)
    b3p = jnp.zeros((1, OUT_PAD), jnp.float32).at[:, :OUT_FEATURES].set(b3)

    return (w1.astype(jnp.bfloat16), b1,
            w2.astype(jnp.bfloat16), b2,
            w3p.astype(jnp.bfloat16), b3p)


def reference_forward(x, params):
    """Pure-JAX reference using the same bf16-quantized weights/activations."""
    w1, b1, w2, b2, w3, b3 = params
    B = x.shape[0]
    xf = x.reshape(B, -1).astype(jnp.bfloat16).astype(jnp.float32)
    h1 = jnp.maximum(xf @ w1.astype(jnp.float32) + b1, 0.0)
    h1 = h1.astype(jnp.bfloat16).astype(jnp.float32)
    h2 = jnp.maximum(h1 @ w2.astype(jnp.float32) + b2, 0.0)
    h2 = h2.astype(jnp.bfloat16).astype(jnp.float32)
    logits = h2 @ w3.astype(jnp.float32) + b3
    return logits[:, :OUT_FEATURES]


if __name__ == "__main__":
    key = jax.random.PRNGKey(0)
    k_param, k_x = jax.random.split(key)
    params = init_params(k_param)

    batch = 4
    x = jax.random.uniform(k_x, (batch, 1, 28, 28), jnp.float32)  # NCHW, MNIST-like

    logits = neural_network_forward(x, params)
    jax.block_until_ready(logits)

    ref = reference_forward(x, params)
    assert logits.shape == (batch, OUT_FEATURES)
    # bf16 matmul inputs + bf16 logits store => loosened tolerance vs pure f32.
    assert jnp.allclose(logits, ref, atol=2e-2, rtol=2e-2), (
        float(jnp.max(jnp.abs(logits - ref))))

    print("KERNEL_OK")
</pallas_src>

<mosaic_0001>
module attributes {stable_mosaic.version = 11 : i64} {
  func.func @mlp_kernel(%arg0: i32, %arg1: memref<4x784xf32, #tpu.memory_space<vmem>>, %arg2: memref<784x512xbf16, #tpu.memory_space<vmem>>, %arg3: memref<1x512xf32, #tpu.memory_space<vmem>>, %arg4: memref<512x512xbf16, #tpu.memory_space<vmem>>, %arg5: memref<1x512xf32, #tpu.memory_space<vmem>>, %arg6: memref<512x128xbf16, #tpu.memory_space<vmem>>, %arg7: memref<1x128xf32, #tpu.memory_space<vmem>>, %arg8: memref<4x128xbf16, #tpu.memory_space<vmem>>) attributes {dimension_semantics = [#tpu.dimension_semantics<parallel>], iteration_bounds = array<i64: 1>, scalar_prefetch = 0 : i64, scratch_operands = 0 : i64, tpu.core_type = #tpu.core_type<tc>, window_params = [{transform_indices = @transform_0, window_bounds = array<i64: 4, 784>}, {pipeline_mode = #tpu.pipeline_mode<synchronous>, transform_indices = @transform_1, window_bounds = array<i64: 784, 512>}, {pipeline_mode = #tpu.pipeline_mode<synchronous>, transform_indices = @transform_2, window_bounds = array<i64: 1, 512>}, {pipeline_mode = #tpu.pipeline_mode<synchronous>, transform_indices = @transform_3, window_bounds = array<i64: 512, 512>}, {pipeline_mode = #tpu.pipeline_mode<synchronous>, transform_indices = @transform_4, window_bounds = array<i64: 1, 512>}, {pipeline_mode = #tpu.pipeline_mode<synchronous>, transform_indices = @transform_5, window_bounds = array<i64: 512, 128>}, {pipeline_mode = #tpu.pipeline_mode<synchronous>, transform_indices = @transform_6, window_bounds = array<i64: 1, 128>}, {transform_indices = @transform_7, window_bounds = array<i64: 4, 128>}]} {
    %c0 = arith.constant 0 : index
    %c0_0 = arith.constant 0 : index
    %0 = vector.load %arg1[%c0, %c0_0] : memref<4x784xf32, #tpu.memory_space<vmem>>, vector<4x784xf32>
    %1 = arith.truncf %0 : vector<4x784xf32> to vector<4x784xbf16>
    %c0_1 = arith.constant 0 : index
    %c0_2 = arith.constant 0 : index
    %2 = vector.load %arg2[%c0_1, %c0_2] : memref<784x512xbf16, #tpu.memory_space<vmem>>, vector<784x512xbf16>
    %cst = arith.constant dense<0.000000e+00> : vector<4x512xf32>
    %3 = tpu.matmul %1, %2, %cst {dimension_numbers = #tpu.dot_dimension_numbers<[1], [0], [0], [1], [0, 0, 1, 1], [], []>} : vector<4x784xbf16>, vector<784x512xbf16>, vector<4x512xf32> -> vector<4x512xf32>
    %c0_3 = arith.constant 0 : index
    %c0_4 = arith.constant 0 : index
    %4 = vector.load %arg3[%c0_3, %c0_4] : memref<1x512xf32, #tpu.memory_space<vmem>>, vector<1x512xf32>
    %5 = vector.broadcast %4 : vector<1x512xf32> to vector<4x512xf32>
    %6 = arith.addf %3, %5 : vector<4x512xf32>
    %cst_5 = arith.constant 0.000000e+00 : f32
    %7 = vector.broadcast %cst_5 : f32 to vector<4x512xf32>
    %8 = arith.maximumf %6, %7 : vector<4x512xf32>
    %9 = arith.truncf %8 : vector<4x512xf32> to vector<4x512xbf16>
    %c0_6 = arith.constant 0 : index
    %c0_7 = arith.constant 0 : index
    %10 = vector.load %arg4[%c0_6, %c0_7] : memref<512x512xbf16, #tpu.memory_space<vmem>>, vector<512x512xbf16>
    %cst_8 = arith.constant dense<0.000000e+00> : vector<4x512xf32>
    %11 = tpu.matmul %9, %10, %cst_8 {dimension_numbers = #tpu.dot_dimension_numbers<[1], [0], [0], [1], [0, 0, 1, 1], [], []>} : vector<4x512xbf16>, vector<512x512xbf16>, vector<4x512xf32> -> vector<4x512xf32>
    %c0_9 = arith.constant 0 : index
    %c0_10 = arith.constant 0 : index
    %12 = vector.load %arg5[%c0_9, %c0_10] : memref<1x512xf32, #tpu.memory_space<vmem>>, vector<1x512xf32>
    %13 = vector.broadcast %12 : vector<1x512xf32> to vector<4x512xf32>
    %14 = arith.addf %11, %13 : vector<4x512xf32>
    %cst_11 = arith.constant 0.000000e+00 : f32
    %15 = vector.broadcast %cst_11 : f32 to vector<4x512xf32>
    %16 = arith.maximumf %14, %15 : vector<4x512xf32>
    %17 = arith.truncf %16 : vector<4x512xf32> to vector<4x512xbf16>
    %c0_12 = arith.constant 0 : index
    %c0_13 = arith.constant 0 : index
    %18 = vector.load %arg6[%c0_12, %c0_13] : memref<512x128xbf16, #tpu.memory_space<vmem>>, vector<512x128xbf16>
    %cst_14 = arith.constant dense<0.000000e+00> : vector<4x128xf32>
    %19 = tpu.matmul %17, %18, %cst_14 {dimension_numbers = #tpu.dot_dimension_numbers<[1], [0], [0], [1], [0, 0, 1, 1], [], []>} : vector<4x512xbf16>, vector<512x128xbf16>, vector<4x128xf32> -> vector<4x128xf32>
    %c0_15 = arith.constant 0 : index
    %c0_16 = arith.constant 0 : index
    %20 = vector.load %arg7[%c0_15, %c0_16] : memref<1x128xf32, #tpu.memory_space<vmem>>, vector<1x128xf32>
    %21 = vector.broadcast %20 : vector<1x128xf32> to vector<4x128xf32>
    %22 = arith.addf %19, %21 : vector<4x128xf32>
    %23 = arith.truncf %22 : vector<4x128xf32> to vector<4x128xbf16>
    %c0_17 = arith.constant 0 : index
    %c0_18 = arith.constant 0 : index
    %24 = vector.load %arg8[%c0_17, %c0_18] : memref<4x128xbf16, #tpu.memory_space<vmem>>, vector<4x128xbf16>
    tpu.vector_store %arg8[%c0_17, %c0_18], %23 {strides = array<i32>} : memref<4x128xbf16, #tpu.memory_space<vmem>>, vector<4x128xbf16>,
    return
  }
  func.func @transform_0(%arg0: i32) -> (i32, i32) {
    %c0_i32 = arith.constant 0 : i32
    %c0_i32_0 = arith.constant 0 : i32
    return %arg0, %c0_i32 : i32, i32
  }
  func.func @transform_1(%arg0: i32) -> (i32, i32) {
    %c0_i32 = arith.constant 0 : i32
    %c0_i32_0 = arith.constant 0 : i32
    %c0_i32_1 = arith.constant 0 : i32
    return %c0_i32, %c0_i32_0 : i32, i32
  }
  func.func @transform_2(%arg0: i32) -> (i32, i32) {
    %c0_i32 = arith.constant 0 : i32
    %c0_i32_0 = arith.constant 0 : i32
    %c0_i32_1 = arith.constant 0 : i32
    return %c0_i32, %c0_i32_0 : i32, i32
  }
  func.func @transform_3(%arg0: i32) -> (i32, i32) {
    %c0_i32 = arith.constant 0 : i32
    %c0_i32_0 = arith.constant 0 : i32
    %c0_i32_1 = arith.constant 0 : i32
    return %c0_i32, %c0_i32_0 : i32, i32
  }
  func.func @transform_4(%arg0: i32) -> (i32, i32) {
    %c0_i32 = arith.constant 0 : i32
    %c0_i32_0 = arith.constant 0 : i32
    %c0_i32_1 = arith.constant 0 : i32
    return %c0_i32, %c0_i32_0 : i32, i32
  }
  func.func @transform_5(%arg0: i32) -> (i32, i32) {
    %c0_i32 = arith.constant 0 : i32
    %c0_i32_0 = arith.constant 0 : i32
    %c0_i32_1 = arith.constant 0 : i32
    return %c0_i32, %c0_i32_0 : i32, i32
  }
  func.func @transform_6(%arg0: i32) -> (i32, i32) {
    %c0_i32 = arith.constant 0 : i32
    %c0_i32_0 = arith.constant 0 : i32
    %c0_i32_1 = arith.constant 0 : i32
    return %c0_i32, %c0_i32_0 : i32, i32
  }
  func.func @transform_7(%arg0: i32) -> (i32, i32) {
    %c0_i32 = arith.constant 0 : i32
    %c0_i32_0 = arith.constant 0 : i32
    return %arg0, %c0_i32 : i32, i32
  }
}

</mosaic_0001>

<llo_original>
// kernel: tpu_custom_call.1
$region0: #{tpu_custom_call.1}
  #allocation0 [shape = 'u32[]', space=smem, size = 0x4, offset = 0x4, fixed_abs, tag = 'smem constant byte address 0x4 - core index']
  #allocation1 [shape = 'u32[144,128]{1,0:T(1,128)}', space=vmem, size = 0x12000, scoped, tag = 'internal scratch']
  %s0 = inlined_call_operand.hbm [shape: f32[4,784], index: 0, kind: input, shape index: {}]
  %s1 = inlined_call_operand.hbm [shape: bf16[784,512], index: 1, kind: input, shape index: {}]
  %s2 = inlined_call_operand.vmem [shape: f32[1,512], index: 2, kind: input, shape index: {}]
  %s3 = inlined_call_operand.hbm [shape: bf16[512,512], index: 3, kind: input, shape index: {}]
  %s4 = inlined_call_operand.vmem [shape: f32[1,512], index: 4, kind: input, shape index: {}]
  %s5 = inlined_call_operand.hbm [shape: bf16[512,128], index: 5, kind: input, shape index: {}]
  %s6 = inlined_call_operand.vmem [shape: f32[1,128], index: 6, kind: input, shape index: {}]
  %s7 = inlined_call_operand.hbm [shape: bf16[4,128], index: 7, kind: output, shape index: {}]
  %s8 = sld [smem:[#allocation0]]
  $region54: #{tpu_custom_call.1} parent=0
    _
  %s10 = ssub.s32 1, %s8
  %s11 = scalar_select 0, %s10, %s8
  $region1: #{tpu_custom_call.1} parent=0
    #allocation2 [shape = 'u8[14336]{0}', space=vmem, size = 0x3800, scoped, tag = 'input window, operand 0, single buffered']
    #allocation3 [shape = 's32[1]{0}', space=sflag, size = 0x4, scoped, tag = 'scoped memory for tpu_custom_call.1']
    #allocation4 [shape = 's32[1]{0}', space=sflag, size = 0x4, scoped, tag = 'scoped memory for tpu_custom_call.1']
    #allocation5 [shape = 'u8[802816]{0}', space=vmem, size = 0xc4000, scoped, tag = 'input window, operand 1, single buffered']
    #allocation6 [shape = 's32[1]{0}', space=sflag, size = 0x4, scoped, tag = 'scoped memory for tpu_custom_call.1']
    #allocation7 [shape = 'u8[524288]{0}', space=vmem, size = 0x80000, scoped, tag = 'input window, operand 3, single buffered']
    #allocation8 [shape = 'u8[131072]{0}', space=vmem, size = 0x20000, scoped, tag = 'input window, operand 5, single buffered']
    #allocation9 [shape = 's32[1]{0}', space=sflag, size = 0x4, scoped, tag = 'scoped memory for tpu_custom_call.1']
    #allocation10 [shape = 'u8[1024]{0}', space=vmem, size = 0x400, scoped, tag = 'output window, operand 0, single buffered']
    %12 = vsyncpa [#allocation3], 0
    %13 = vsyncpa [#allocation6], 0
    %14 = vsyncpa [#allocation9], 0
    %15 = vsyncpa [#allocation4], 0
    // Predicated region
    $region2: #{tpu_custom_call.1} parent=1 // pred_check
      _
    $region3: #{tpu_custom_call.1} parent=1 // pred_check_branch
      %17 = sbr.rel (0) target = $region5
    $region4: #{tpu_custom_call.1} parent=1 // pred_region
      %s19 = ssub.s32 448, 448
      %20 = vsyncadd [#allocation3], %s19
      %s22 = sshll.u32 [#allocation2], 4
      %s23 = int_to_ptr.vmem [resolvable:$true] %s22
      %25 = dma.hbm_to_vmem [thread:$0]  %s0, 448, %s23, [#allocation3]
    $region5: #{tpu_custom_call.1} parent=1 // pred_fallthru
      _
    // Predicated region
    $region6: #{tpu_custom_call.1} parent=1 // pred_check
      _
    $region7: #{tpu_custom_call.1} parent=1 // pred_check_branch
      %27 = sbr.rel (0) target = $region9
    $region8: #{tpu_custom_call.1} parent=1 // pred_region
      %s29 = ssub.s32 25088, 25088
      %30 = vsyncadd [#allocation6], %s29
      %s31 = sshll.u32 [#allocation5], 4
      %s32 = int_to_ptr.vmem [resolvable:$true] %s31
      %37 = dma.hbm_to_vmem [thread:$0]  %s1, 25088, %s32, [#allocation6], 256, 256, 16
    $region9: #{tpu_custom_call.1} parent=1 // pred_fallthru
      _
    // Predicated region
    $region10: #{tpu_custom_call.1} parent=1 // pred_check
      _
    $region11: #{tpu_custom_call.1} parent=1 // pred_check_branch
      %39 = sbr.rel (0) target = $region13
    $region12: #{tpu_custom_call.1} parent=1 // pred_region
      _
    $region13: #{tpu_custom_call.1} parent=1 // pred_fallthru
      _
    // Predicated region
    $region14: #{tpu_custom_call.1} parent=1 // pred_check
      _
    $region15: #{tpu_custom_call.1} parent=1 // pred_check_branch
      %41 = sbr.rel (0) target = $region17
    $region16: #{tpu_custom_call.1} parent=1 // pred_region
      %s43 = ssub.s32 16384, 16384
      %44 = vsyncadd [#allocation6], %s43
      %s45 = sshll.u32 [#allocation7], 4
      %s46 = int_to_ptr.vmem [resolvable:$true] %s45
      %51 = dma.hbm_to_vmem [thread:$0]  %s3, 16384, %s46, [#allocation6], 256, 256, 16
    $region17: #{tpu_custom_call.1} parent=1 // pred_fallthru
      _
    // Predicated region
    $region18: #{tpu_custom_call.1} parent=1 // pred_check
      _
    $region19: #{tpu_custom_call.1} parent=1 // pred_check_branch
      %53 = sbr.rel (0) target = $region21
    $region20: #{tpu_custom_call.1} parent=1 // pred_region
      _
    $region21: #{tpu_custom_call.1} parent=1 // pred_fallthru
      _
    // Predicated region
    $region22: #{tpu_custom_call.1} parent=1 // pred_check
      _
    $region23: #{tpu_custom_call.1} parent=1 // pred_check_branch
      %55 = sbr.rel (0) target = $region25
    $region24: #{tpu_custom_call.1} parent=1 // pred_region
      %s57 = ssub.s32 4096, 4096
      %58 = vsyncadd [#allocation9], %s57
      %s59 = sshll.u32 [#allocation8], 4
      %s60 = int_to_ptr.vmem [resolvable:$true] %s59
      %65 = dma.hbm_to_vmem [thread:$0]  %s5, 4096, %s60, [#allocation9], 64, 64, 4
    $region25: #{tpu_custom_call.1} parent=1 // pred_fallthru
      _
    // Predicated region
    $region26: #{tpu_custom_call.1} parent=1 // pred_check
      _
    $region27: #{tpu_custom_call.1} parent=1 // pred_check_branch
      %67 = sbr.rel (0) target = $region29
    $region28: #{tpu_custom_call.1} parent=1 // pred_region
      _
    $region29: #{tpu_custom_call.1} parent=1 // pred_fallthru
      _
    // Predicated region
    $region30: #{tpu_custom_call.1} parent=1 // pred_check
      _
    $region31: #{tpu_custom_call.1} parent=1 // pred_check_branch
      %69 = sbr.rel (0) target = $region33
    $region32: #{tpu_custom_call.1} parent=1 // pred_region
      %70 = dma.done [#allocation3], 448
    $region33: #{tpu_custom_call.1} parent=1 // pred_fallthru
      _
    // Predicated region
    $region34: #{tpu_custom_call.1} parent=1 // pred_check
      _
    $region35: #{tpu_custom_call.1} parent=1 // pred_check_branch
      %72 = sbr.rel (0) target = $region37
    $region36: #{tpu_custom_call.1} parent=1 // pred_region
      %73 = dma.done [#allocation6], 25088
    $region37: #{tpu_custom_call.1} parent=1 // pred_fallthru
      _
    // Predicated region
    $region38: #{tpu_custom_call.1} parent=1 // pred_check
      _
    $region39: #{tpu_custom_call.1} parent=1 // pred_check_branch
      %75 = sbr.rel (0) target = $region41
    $region40: #{tpu_custom_call.1} parent=1 // pred_region
      %76 = dma.done [#allocation6], 16384
    $region41: #{tpu_custom_call.1} parent=1 // pred_fallthru
      _
    // Predicated region
    $region42: #{tpu_custom_call.1} parent=1 // pred_check
      _
    $region43: #{tpu_custom_call.1} parent=1 // pred_check_branch
      %78 = sbr.rel (0) target = $region45
    $region44: #{tpu_custom_call.1} parent=1 // pred_region
      %79 = dma.done [#allocation9], 4096
    $region45: #{tpu_custom_call.1} parent=1 // pred_fallthru
      _
    %v81 = vld [vmem:[#allocation2] sm:$0xff]
    %v82 = vld [vmem:[#allocation2 + $0x8] sm:$0xff]
    %v83 = vld [vmem:[#allocation2 + $0x10] sm:$0xff]
    %v84 = vld [vmem:[#allocation2 + $0x18] sm:$0xf]
    %v88 = vcombine.high %v81, %v81
    %v89 = vcombine.high %v82, %v82
    %v90 = vcombine.high %v83, %v83
    %v94 = vpack.c.bf16 %v81, %v81
    %v95 = vpack.c.bf16 %v88, %v88
    %v96 = vpack.c.bf16 %v82, %v82
    %v97 = vpack.c.bf16 %v89, %v89
    %v98 = vpack.c.bf16 %v83, %v83
    %v99 = vpack.c.bf16 %v90, %v90
    %v100 = vpack.c.bf16 %v84, %v84
    %v101 = vld [vmem:[#allocation5] sm:$0xff]
    %v102 = vld [vmem:[#allocation5 + $0x8] sm:$0xff]
    %v103 = vld [vmem:[#allocation5 + $0x10] sm:$0xff]
    %v104 = vld [vmem:[#allocation5 + $0x18] sm:$0xff]
    %v105 = vld [vmem:[#allocation5 + $0x20] sm:$0xff]
    %v106 = vld [vmem:[#allocation5 + $0x28] sm:$0xff]
    %v107 = vld [vmem:[#allocation5 + $0x30] sm:$0xff]
    %v108 = vld [vmem:[#allocation5 + $0x38] sm:$0xff]
    %v109 = vld [vmem:[#allocation5 + $0x40] sm:$0xff]
    %v110 = vld [vmem:[#allocation5 + $0x48] sm:$0xff]
    %v111 = vld [vmem:[#allocation5 + $0x50] sm:$0xff]
    %v112 = vld [vmem:[#allocation5 + $0x58] sm:$0xff]
    %v113 = vld [vmem:[#allocation5 + $0x60] sm:$0xff]
    %v114 = vld [vmem:[#allocation5 + $0x68] sm:$0xff]
    %v115 = vld [vmem:[#allocation5 + $0x70] sm:$0xff]
    %v116 = vld [vmem:[#allocation5 + $0x78] sm:$0xff]
    %v117 = vld [vmem:[#allocation5 + $0x80] sm:$0xff]
    %v118 = vld [vmem:[#allocation5 + $0x88] sm:$0xff]
    %v119 = vld [vmem:[#allocation5 + $0x90] sm:$0xff]
    %v120 = vld [vmem:[#allocation5 + $0x98] sm:$0xff]
    %v121 = vld [vmem:[#allocation5 + $0xa0] sm:$0xff]
    %v122 = vld [vmem:[#allocation5 + $0xa8] sm:$0xff]
    %v123 = vld [vmem:[#allocation5 + $0xb0] sm:$0xff]
    %v124 = vld [vmem:[#allocation5 + $0xb8] sm:$0xff]
    %v125 = vld [vmem:[#allocation5 + $0xc0] sm:$0xff]
    %v126 = vld [vmem:[#allocation5 + $0xc8] sm:$0xff]
    %v127 = vld [vmem:[#allocation5 + $0xd0] sm:$0xff]
    %v128 = vld [vmem:[#allocation5 + $0xd8] sm:$0xff]
    %v129 = vld [vmem:[#allocation5 + $0xe0] sm:$0xff]
    %v130 = vld [vmem:[#allocation5 + $0xe8] sm:$0xff]
    %v131 = vld [vmem:[#allocation5 + $0xf0] sm:$0xff]
    %v132 = vld [vmem:[#allocation5 + $0xf8] sm:$0xff]
    %v133 = vld [vmem:[#allocation5 + $0x100] sm:$0xff]
    %v134 = vld [vmem:[#allocation5 + $0x108] sm:$0xff]
    %v135 = vld [vmem:[#allocation5 + $0x110] sm:$0xff]
    %v136 = vld [vmem:[#allocation5 + $0x118] sm:$0xff]
    %v137 = vld [vmem:[#allocation5 + $0x120] sm:$0xff]
    %v138 = vld [vmem:[#allocation5 + $0x128] sm:$0xff]
    %v139 = vld [vmem:[#allocation5 + $0x130] sm:$0xff]
    %v140 = vld [vmem:[#allocation5 + $0x138] sm:$0xff]
    %v141 = vld [vmem:[#allocation5 + $0x140] sm:$0xff]
    %v142 = vld [vmem:[#allocation5 + $0x148] sm:$0xff]
    %v143 = vld [vmem:[#allocation5 + $0x150] sm:$0xff]
    %v144 = vld [vmem:[#allocation5 + $0x158] sm:$0xff]
    %v145 = vld [vmem:[#allocation5 + $0x160] sm:$0xff]
    %v146 = vld [vmem:[#allocation5 + $0x168] sm:$0xff]
    %v147 = vld [vmem:[#allocation5 + $0x170] sm:$0xff]
    %v148 = vld [vmem:[#allocation5 + $0x178] sm:$0xff]
    %v149 = vld [vmem:[#allocation5 + $0x180] sm:$0xff]
    %v150 = vld [vmem:[#allocation5 + $0x188] sm:$0xff]
    %v151 = vld [vmem:[#allocation5 + $0x190] sm:$0xff]
    %v152 = vld [vmem:[#allocation5 + $0x198] sm:$0xff]
    %v153 = vld [vmem:[#allocation5 + $0x1a0] sm:$0xff]
    %v154 = vld [vmem:[#allocation5 + $0x1a8] sm:$0xff]
    %v155 = vld [vmem:[#allocation5 + $0x1b0] sm:$0xff]
    %v156 = vld [vmem:[#allocation5 + $0x1b8] sm:$0xff]
    %v157 = vld [vmem:[#allocation5 + $0x1c0] sm:$0xff]
    %v158 = vld [vmem:[#allocation5 + $0x1c8] sm:$0xff]
    %v159 = vld [vmem:[#allocation5 + $0x1d0] sm:$0xff]
    %v160 = vld [vmem:[#allocation5 + $0x1d8] sm:$0xff]
    %v161 = vld [vmem:[#allocation5 + $0x1e0] sm:$0xff]
    %v162 = vld [vmem:[#allocation5 + $0x1e8] sm:$0xff]
    %v163 = vld [vmem:[#allocation5 + $0x1f0] sm:$0xff]
    %v164 = vld [vmem:[#allocation5 + $0x1f8] sm:$0xff]
    %v165 = vld [vmem:[#allocation5 + $0x200] sm:$0xff]
    %v166 = vld [vmem:[#allocation5 + $0x208] sm:$0xff]
    %v167 = vld [vmem:[#allocation5 + $0x210] sm:$0xff]
    %v168 = vld [vmem:[#allocation5 + $0x218] sm:$0xff]
    %v169 = vld [vmem:[#allocation5 + $0x220] sm:$0xff]
    %v170 = vld [vmem:[#allocation5 + $0x228] sm:$0xff]
    %v171 = vld [vmem:[#allocation5 + $0x230] sm:$0xff]
    %v172 = vld [vmem:[#allocation5 + $0x238] sm:$0xff]
    %v173 = vld [vmem:[#allocation5 + $0x240] sm:$0xff]
    %v174 = vld [vmem:[#allocation5 + $0x248] sm:$0xff]
    %v175 = vld [vmem:[#allocation5 + $0x250] sm:$0xff]
    %v176 = vld [vmem:[#allocation5 + $0x258] sm:$0xff]
    %v177 = vld [vmem:[#allocation5 + $0x260] sm:$0xff]
    %v178 = vld [vmem:[#allocation5 + $0x268] sm:$0xff]
    %v179 = vld [vmem:[#allocation5 + $0x270] sm:$0xff]
    %v180 = vld [vmem:[#allocation5 + $0x278] sm:$0xff]
    %v181 = vld [vmem:[#allocation5 + $0x280] sm:$0xff]
    %v182 = vld [vmem:[#allocation5 + $0x288] sm:$0xff]
    %v183 = vld [vmem:[#allocation5 + $0x290] sm:$0xff]
    %v184 = vld [vmem:[#allocation5 + $0x298] sm:$0xff]
    %v185 = vld [vmem:[#allocation5 + $0x2a0] sm:$0xff]
    %v186 = vld [vmem:[#allocation5 + $0x2a8] sm:$0xff]
    %v187 = vld [vmem:[#allocation5 + $0x2b0] sm:$0xff]
    %v188 = vld [vmem:[#allocation5 + $0x2b8] sm:$0xff]
    %v189 = vld [vmem:[#allocation5 + $0x2c0] sm:$0xff]
    %v190 = vld [vmem:[#allocation5 + $0x2c8] sm:$0xff]
    %v191 = vld [vmem:[#allocation5 + $0x2d0] sm:$0xff]
    %v192 = vld [vmem:[#allocation5 + $0x2d8] sm:$0xff]
    %v193 = vld [vmem:[#allocation5 + $0x2e0] sm:$0xff]
    %v194 = vld [vmem:[#allocation5 + $0x2e8] sm:$0xff]
    %v195 = vld [vmem:[#allocation5 + $0x2f0] sm:$0xff]
    %v196 = vld [vmem:[#allocation5 + $0x2f8] sm:$0xff]
    %v197 = vld [vmem:[#allocation5 + $0x300] sm:$0xff]
    %v198 = vld [vmem:[#allocation5 + $0x308] sm:$0xff]
    %v199 = vld [vmem:[#allocation5 + $0x310] sm:$0xff]
    %v200 = vld [vmem:[#allocation5 + $0x318] sm:$0xff]
    %v201 = vld [vmem:[#allocation5 + $0x320] sm:$0xff]
    %v202 = vld [vmem:[#allocation5 + $0x328] sm:$0xff]
    %v203 = vld [vmem:[#allocation5 + $0x330] sm:$0xff]
    %v204 = vld [vmem:[#allocation5 + $0x338] sm:$0xff]
    %v205 = vld [vmem:[#allocation5 + $0x340] sm:$0xff]
    %v206 = vld [vmem:[#allocation5 + $0x348] sm:$0xff]
    %v207 = vld [vmem:[#allocation5 + $0x350] sm:$0xff]
    %v208 = vld [vmem:[#allocation5 + $0x358] sm:$0xff]
    %v209 = vld [vmem:[#allocation5 + $0x360] sm:$0xff]
    %v210 = vld [vmem:[#allocation5 + $0x368] sm:$0xff]
    %v211 = vld [vmem:[#allocation5 + $0x370] sm:$0xff]
    %v212 = vld [vmem:[#allocation5 + $0x378] sm:$0xff]
    %v213 = vld [vmem:[#allocation5 + $0x380] sm:$0xff]
    %v214 = vld [vmem:[#allocation5 + $0x388] sm:$0xff]
    %v215 = vld [vmem:[#allocation5 + $0x390] sm:$0xff]
    %v216 = vld [vmem:[#allocation5 + $0x398] sm:$0xff]
    %v217 = vld [vmem:[#allocation5 + $0x3a0] sm:$0xff]
    %v218 = vld [vmem:[#allocation5 + $0x3a8] sm:$0xff]
    %v219 = vld [vmem:[#allocation5 + $0x3b0] sm:$0xff]
    %v220 = vld [vmem:[#allocation5 + $0x3b8] sm:$0xff]
    %v221 = vld [vmem:[#allocation5 + $0x3c0] sm:$0xff]
    %v222 = vld [vmem:[#allocation5 + $0x3c8] sm:$0xff]
    %v223 = vld [vmem:[#allocation5 + $0x3d0] sm:$0xff]
    %v224 = vld [vmem:[#allocation5 + $0x3d8] sm:$0xff]
    %v225 = vld [vmem:[#allocation5 + $0x3e0] sm:$0xff]
    %v226 = vld [vmem:[#allocation5 + $0x3e8] sm:$0xff]
    %v227 = vld [vmem:[#allocation5 + $0x3f0] sm:$0xff]
    %v228 = vld [vmem:[#allocation5 + $0x3f8] sm:$0xff]
    %v229 = vld [vmem:[#allocation5 + $0x400] sm:$0xff]
    %v230 = vld [vmem:[#allocation5 + $0x408] sm:$0xff]
    %v231 = vld [vmem:[#allocation5 + $0x410] sm:$0xff]
    %v232 = vld [vmem:[#allocation5 + $0x418] sm:$0xff]
    %v233 = vld [vmem:[#allocation5 + $0x420] sm:$0xff]
    %v234 = vld [vmem:[#allocation5 + $0x428] sm:$0xff]
    %v235 = vld [vmem:[#allocation5 + $0x430] sm:$0xff]
    %v236 = vld [vmem:[#allocation5 + $0x438] sm:$0xff]
    %v237 = vld [vmem:[#allocation5 + $0x440] sm:$0xff]
    %v238 = vld [vmem:[#allocation5 + $0x448] sm:$0xff]
    %v239 = vld [vmem:[#allocation5 + $0x450] sm:$0xff]
    %v240 = vld [vmem:[#allocation5 + $0x458] sm:$0xff]
    %v241 = vld [vmem:[#allocation5 + $0x460] sm:$0xff]
    %v242 = vld [vmem:[#allocation5 + $0x468] sm:$0xff]
    %v243 = vld [vmem:[#allocation5 + $0x470] sm:$0xff]
    %v244 = vld [vmem:[#allocation5 + $0x478] sm:$0xff]
    %v245 = vld [vmem:[#allocation5 + $0x480] sm:$0xff]
    %v246 = vld [vmem:[#allocation5 + $0x488] sm:$0xff]
    %v247 = vld [vmem:[#allocation5 + $0x490] sm:$0xff]
    %v248 = vld [vmem:[#allocation5 + $0x498] sm:$0xff]
    %v249 = vld [vmem:[#allocation5 + $0x4a0] sm:$0xff]
    %v250 = vld [vmem:[#allocation5 + $0x4a8] sm:$0xff]
    %v251 = vld [vmem:[#allocation5 + $0x4b0] sm:$0xff]
    %v252 = vld [vmem:[#allocation5 + $0x4b8] sm:$0xff]
    %v253 = vld [vmem:[#allocation5 + $0x4c0] sm:$0xff]
    %v254 = vld [vmem:[#allocation5 + $0x4c8] sm:$0xff]
    %v255 = vld [vmem:[#allocation5 + $0x4d0] sm:$0xff]
    %v256 = vld [vmem:[#allocation5 + $0x4d8] sm:$0xff]
    %v257 = vld [vmem:[#allocation5 + $0x4e0] sm:$0xff]
    %v258 = vld [vmem:[#allocation5 + $0x4e8] sm:$0xff]
    %v259 = vld [vmem:[#allocation5 + $0x4f0] sm:$0xff]
    %v260 = vld [vmem:[#allocation5 + $0x4f8] sm:$0xff]
    %v261 = vld [vmem:[#allocation5 + $0x500] sm:$0xff]
    %v262 = vld [vmem:[#allocation5 + $0x508] sm:$0xff]
    %v263 = vld [vmem:[#allocation5 + $0x510] sm:$0xff]
    %v264 = vld [vmem:[#allocation5 + $0x518] sm:$0xff]
    %v265 = vld [vmem:[#allocation5 + $0x520] sm:$0xff]
    %v266 = vld [vmem:[#allocation5 + $0x528] sm:$0xff]
    %v267 = vld [vmem:[#allocation5 + $0x530] sm:$0xff]
    %v268 = vld [vmem:[#allocation5 + $0x538] sm:$0xff]
    %v269 = vld [vmem:[#allocation5 + $0x540] sm:$0xff]
    %v270 = vld [vmem:[#allocation5 + $0x548] sm:$0xff]
    %v271 = vld [vmem:[#allocation5 + $0x550] sm:$0xff]
    %v272 = vld [vmem:[#allocation5 + $0x558] sm:$0xff]
    %v273 = vld [vmem:[#allocation5 + $0x560] sm:$0xff]
    %v274 = vld [vmem:[#allocation5 + $0x568] sm:$0xff]
    %v275 = vld [vmem:[#allocation5 + $0x570] sm:$0xff]
    %v276 = vld [vmem:[#allocation5 + $0x578] sm:$0xff]
    %v277 = vld [vmem:[#allocation5 + $0x580] sm:$0xff]
    %v278 = vld [vmem:[#allocation5 + $0x588] sm:$0xff]
    %v279 = vld [vmem:[#allocation5 + $0x590] sm:$0xff]
    %v280 = vld [vmem:[#allocation5 + $0x598] sm:$0xff]
    %v281 = vld [vmem:[#allocation5 + $0x5a0] sm:$0xff]
    %v282 = vld [vmem:[#allocation5 + $0x5a8] sm:$0xff]
    %v283 = vld [vmem:[#allocation5 + $0x5b0] sm:$0xff]
    %v284 = vld [vmem:[#allocation5 + $0x5b8] sm:$0xff]
    %v285 = vld [vmem:[#allocation5 + $0x5c0] sm:$0xff]
    %v286 = vld [vmem:[#allocation5 + $0x5c8] sm:$0xff]
    %v287 = vld [vmem:[#allocation5 + $0x5d0] sm:$0xff]
    %v288 = vld [vmem:[#allocation5 + $0x5d8] sm:$0xff]
    %v289 = vld [vmem:[#allocation5 + $0x5e0] sm:$0xff]
    %v290 = vld [vmem:[#allocation5 + $0x5e8] sm:$0xff]
    %v291 = vld [vmem:[#allocation5 + $0x5f0] sm:$0xff]
    %v292 = vld [vmem:[#allocation5 + $0x5f8] sm:$0xff]
    %v293 = vld [vmem:[#allocation5 + $0x600] sm:$0xff]
    %v294 = vld [vmem:[#allocation5 + $0x608] sm:$0xff]
    %v295 = vld [vmem:[#allocation5 + $0x610] sm:$0xff]
    %v296 = vld [vmem:[#allocation5 + $0x618] sm:$0xff]
    %v297 = vld [vmem:[%s2] sm:$0xf]
    %v299 = vlaneseq
    %v300 = vshrl.u32 %v299, 7
    %v301 = vsub.s32 0, %v300
    %v302 = vrot.slane %v297, %v301
    %v303 = vlaneseq
    %v304 = vshrl.u32 %v303, 7
    %v305 = vsub.s32 1, %v304
    %v306 = vrot.slane %v297, %v305
    %v307 = vlaneseq
    %v308 = vshrl.u32 %v307, 7
    %v309 = vsub.s32 2, %v308
    %v310 = vrot.slane %v297, %v309
    %v311 = vlaneseq
    %v312 = vshrl.u32 %v311, 7
    %v313 = vsub.s32 3, %v312
    %v314 = vrot.slane %v297, %v313
    %v515 = vunpack.c.l.b16 %v101
    %v516 = vunpack.c.h.b16 %v101
    %v517 = vunpack.c.l.b16 %v102
    %v518 = vunpack.c.h.b16 %v102
    %v519 = vunpack.c.l.b16 %v103
    %v520 = vunpack.c.h.b16 %v103
    %v521 = vunpack.c.l.b16 %v104
    %v522 = vunpack.c.h.b16 %v104
    %v523 = vunpack.c.l.b16 %v105
    %v524 = vunpack.c.h.b16 %v105
    %v525 = vunpack.c.l.b16 %v106
    %v526 = vunpack.c.h.b16 %v106
    %v527 = vunpack.c.l.b16 %v107
    %v528 = vunpack.c.h.b16 %v107
    %v529 = vunpack.c.l.b16 %v108
    %v530 = vunpack.c.h.b16 %v108
    %v531 = vunpack.c.l.b16 %v109
    %v532 = vunpack.c.h.b16 %v109
    %v533 = vunpack.c.l.b16 %v110
    %v534 = vunpack.c.h.b16 %v110
    %v535 = vunpack.c.l.b16 %v111
    %v536 = vunpack.c.h.b16 %v111
    %v537 = vunpack.c.l.b16 %v112
    %v538 = vunpack.c.h.b16 %v112
    %v539 = vunpack.c.l.b16 %v113
    %v540 = vunpack.c.h.b16 %v113
    %v541 = vunpack.c.l.b16 %v114
    %v542 = vunpack.c.h.b16 %v114
    %v543 = vunpack.c.l.b16 %v115
    %v544 = vunpack.c.h.b16 %v115
    %v545 = vunpack.c.l.b16 %v116
    %v546 = vunpack.c.h.b16 %v116
    %v547 = vunpack.c.l.b16 %v117
    %v548 = vunpack.c.h.b16 %v117
    %v549 = vunpack.c.l.b16 %v118
    %v550 = vunpack.c.h.b16 %v118
    %v551 = vunpack.c.l.b16 %v119
    %v552 = vunpack.c.h.b16 %v119
    %v553 = vunpack.c.l.b16 %v120
    %v554 = vunpack.c.h.b16 %v120
    %v555 = vunpack.c.l.b16 %v121
    %v556 = vunpack.c.h.b16 %v121
    %v557 = vunpack.c.l.b16 %v122
    %v558 = vunpack.c.h.b16 %v122
    %v559 = vunpack.c.l.b16 %v123
    %v560 = vunpack.c.h.b16 %v123
    %v561 = vunpack.c.l.b16 %v124
    %v562 = vunpack.c.h.b16 %v124
    %v563 = vunpack.c.l.b16 %v125
    %v564 = vunpack.c.h.b16 %v125
    %v565 = vunpack.c.l.b16 %v126
    %v566 = vunpack.c.h.b16 %v126
    %v567 = vunpack.c.l.b16 %v127
    %v568 = vunpack.c.h.b16 %v127
    %v569 = vunpack.c.l.b16 %v128
    %v570 = vunpack.c.h.b16 %v128
    %v571 = vunpack.c.l.b16 %v129
    %v572 = vunpack.c.h.b16 %v129
    %v573 = vunpack.c.l.b16 %v130
    %v574 = vunpack.c.h.b16 %v130
    %v575 = vunpack.c.l.b16 %v131
    %v576 = vunpack.c.h.b16 %v131
    %v577 = vunpack.c.l.b16 %v132
    %v578 = vunpack.c.h.b16 %v132
    %v579 = vunpack.c.l.b16 %v133
    %v580 = vunpack.c.h.b16 %v133
    %v581 = vunpack.c.l.b16 %v134
    %v582 = vunpack.c.h.b16 %v134
    %v583 = vunpack.c.l.b16 %v135
    %v584 = vunpack.c.h.b16 %v135
    %v585 = vunpack.c.l.b16 %v136
    %v586 = vunpack.c.h.b16 %v136
    %v587 = vunpack.c.l.b16 %v137
    %v588 = vunpack.c.h.b16 %v137
    %v589 = vunpack.c.l.b16 %v138
    %v590 = vunpack.c.h.b16 %v138
    %v591 = vunpack.c.l.b16 %v139
    %v592 = vunpack.c.h.b16 %v139
    %v593 = vunpack.c.l.b16 %v140
    %v594 = vunpack.c.h.b16 %v140
    %v595 = vunpack.c.l.b16 %v141
    %v596 = vunpack.c.h.b16 %v141
    %v597 = vunpack.c.l.b16 %v142
    %v598 = vunpack.c.h.b16 %v142
    %v599 = vunpack.c.l.b16 %v143
    %v600 = vunpack.c.h.b16 %v143
    %v601 = vunpack.c.l.b16 %v144
    %v602 = vunpack.c.h.b16 %v144
    %v603 = vunpack.c.l.b16 %v145
    %v604 = vunpack.c.h.b16 %v145
    %v605 = vunpack.c.l.b16 %v146
    %v606 = vunpack.c.h.b16 %v146
    %v607 = vunpack.c.l.b16 %v147
    %v608 = vunpack.c.h.b16 %v147
    %v609 = vunpack.c.l.b16 %v148
    %v610 = vunpack.c.h.b16 %v148
    %v611 = vunpack.c.l.b16 %v149
    %v612 = vunpack.c.h.b16 %v149
    %v613 = vunpack.c.l.b16 %v150
    %v614 = vunpack.c.h.b16 %v150
    %v615 = vunpack.c.l.b16 %v151
    %v616 = vunpack.c.h.b16 %v151
    %v617 = vunpack.c.l.b16 %v152
    %v618 = vunpack.c.h.b16 %v152
    %v619 = vunpack.c.l.b16 %v153
    %v620 = vunpack.c.h.b16 %v153
    %v621 = vunpack.c.l.b16 %v154
    %v622 = vunpack.c.h.b16 %v154
    %v623 = vunpack.c.l.b16 %v155
    %v624 = vunpack.c.h.b16 %v155
    %v625 = vunpack.c.l.b16 %v156
    %v626 = vunpack.c.h.b16 %v156
    %v627 = vunpack.c.l.b16 %v157
    %v628 = vunpack.c.h.b16 %v157
    %v629 = vunpack.c.l.b16 %v158
    %v630 = vunpack.c.h.b16 %v158
    %v631 = vunpack.c.l.b16 %v159
    %v632 = vunpack.c.h.b16 %v159
    %v633 = vunpack.c.l.b16 %v160
    %v634 = vunpack.c.h.b16 %v160
    %v635 = vunpack.c.l.b16 %v161
    %v636 = vunpack.c.h.b16 %v161
    %v637 = vunpack.c.l.b16 %v162
    %v638 = vunpack.c.h.b16 %v162
    %v639 = vunpack.c.l.b16 %v163
    %v640 = vunpack.c.h.b16 %v163
    %v641 = vunpack.c.l.b16 %v164
    %v642 = vunpack.c.h.b16 %v164
    %v643 = vunpack.c.l.b16 %v165
    %v644 = vunpack.c.h.b16 %v165
    %v645 = vunpack.c.l.b16 %v166
    %v646 = vunpack.c.h.b16 %v166
    %v647 = vunpack.c.l.b16 %v167
    %v648 = vunpack.c.h.b16 %v167
    %v649 = vunpack.c.l.b16 %v168
    %v650 = vunpack.c.h.b16 %v168
    %v651 = vunpack.c.l.b16 %v169
    %v652 = vunpack.c.h.b16 %v169
    %v653 = vunpack.c.l.b16 %v170
    %v654 = vunpack.c.h.b16 %v170
    %v655 = vunpack.c.l.b16 %v171
    %v656 = vunpack.c.h.b16 %v171
    %v657 = vunpack.c.l.b16 %v172
    %v658 = vunpack.c.h.b16 %v172
    %v659 = vunpack.c.l.b16 %v173
    %v660 = vunpack.c.h.b16 %v173
    %v661 = vunpack.c.l.b16 %v174
    %v662 = vunpack.c.h.b16 %v174
    %v663 = vunpack.c.l.b16 %v175
    %v664 = vunpack.c.h.b16 %v175
    %v665 = vunpack.c.l.b16 %v176
    %v666 = vunpack.c.h.b16 %v176
    %v667 = vunpack.c.l.b16 %v177
    %v668 = vunpack.c.h.b16 %v177
    %v669 = vunpack.c.l.b16 %v178
    %v670 = vunpack.c.h.b16 %v178
    %v671 = vunpack.c.l.b16 %v179
    %v672 = vunpack.c.h.b16 %v179
    %v673 = vunpack.c.l.b16 %v180
    %v674 = vunpack.c.h.b16 %v180
    %v675 = vunpack.c.l.b16 %v181
    %v676 = vunpack.c.h.b16 %v181
    %v677 = vunpack.c.l.b16 %v182
    %v678 = vunpack.c.h.b16 %v182
    %v679 = vunpack.c.l.b16 %v183
    %v680 = vunpack.c.h.b16 %v183
    %v681 = vunpack.c.l.b16 %v184
    %v682 = vunpack.c.h.b16 %v184
    %v683 = vunpack.c.l.b16 %v185
    %v684 = vunpack.c.h.b16 %v185
    %v685 = vunpack.c.l.b16 %v186
    %v686 = vunpack.c.h.b16 %v186
    %v687 = vunpack.c.l.b16 %v187
    %v688 = vunpack.c.h.b16 %v187
    %v689 = vunpack.c.l.b16 %v188
    %v690 = vunpack.c.h.b16 %v188
    %v691 = vunpack.c.l.b16 %v189
    %v692 = vunpack.c.h.b16 %v189
    %v693 = vunpack.c.l.b16 %v190
    %v694 = vunpack.c.h.b16 %v190
    %v695 = vunpack.c.l.b16 %v191
    %v696 = vunpack.c.h.b16 %v191
    %v697 = vunpack.c.l.b16 %v192
    %v698 = vunpack.c.h.b16 %v192
    %v699 = vunpack.c.l.b16 %v193
    %v700 = vunpack.c.h.b16 %v193
    %v701 = vunpack.c.l.b16 %v194
    %v702 = vunpack.c.h.b16 %v194
    %v703 = vunpack.c.l.b16 %v195
    %v704 = vunpack.c.h.b16 %v195
    %v705 = vunpack.c.l.b16 %v196
    %v706 = vunpack.c.h.b16 %v196
    %v707 = vunpack.c.l.b16 %v197
    %v708 = vunpack.c.h.b16 %v197
    %v709 = vunpack.c.l.b16 %v198
    %v710 = vunpack.c.h.b16 %v198
    %v711 = vunpack.c.l.b16 %v199
    %v712 = vunpack.c.h.b16 %v199
    %v713 = vunpack.c.l.b16 %v200
    %v714 = vunpack.c.h.b16 %v200
    %v715 = vunpack.c.l.b16 %v201
    %v716 = vunpack.c.h.b16 %v201
    %v717 = vunpack.c.l.b16 %v202
    %v718 = vunpack.c.h.b16 %v202
    %v719 = vunpack.c.l.b16 %v203
    %v720 = vunpack.c.h.b16 %v203
    %v721 = vunpack.c.l.b16 %v204
    %v722 = vunpack.c.h.b16 %v204
    %v723 = vunpack.c.l.b16 %v205
    %v724 = vunpack.c.h.b16 %v205
    %v725 = vunpack.c.l.b16 %v206
    %v726 = vunpack.c.h.b16 %v206
    %v727 = vunpack.c.l.b16 %v207
    %v728 = vunpack.c.h.b16 %v207
    %v729 = vunpack.c.l.b16 %v208
    %v730 = vunpack.c.h.b16 %v208
    %v731 = vunpack.c.l.b16 %v209
    %v732 = vunpack.c.h.b16 %v209
    %v733 = vunpack.c.l.b16 %v210
    %v734 = vunpack.c.h.b16 %v210
    %v735 = vunpack.c.l.b16 %v211
    %v736 = vunpack.c.h.b16 %v211
    %v737 = vunpack.c.l.b16 %v212
    %v738 = vunpack.c.h.b16 %v212
    %v739 = vunpack.c.l.b16 %v213
    %v740 = vunpack.c.h.b16 %v213
    %v741 = vunpack.c.l.b16 %v214
    %v742 = vunpack.c.h.b16 %v214
    %v743 = vunpack.c.l.b16 %v215
    %v744 = vunpack.c.h.b16 %v215
    %v745 = vunpack.c.l.b16 %v216
    %v746 = vunpack.c.h.b16 %v216
    %v747 = vunpack.c.l.b16 %v217
    %v748 = vunpack.c.h.b16 %v217
    %v749 = vunpack.c.l.b16 %v218
    %v750 = vunpack.c.h.b16 %v218
    %v751 = vunpack.c.l.b16 %v219
    %v752 = vunpack.c.h.b16 %v219
    %v753 = vunpack.c.l.b16 %v220
    %v754 = vunpack.c.h.b16 %v220
    %v755 = vunpack.c.l.b16 %v221
    %v756 = vunpack.c.h.b16 %v221
    %v757 = vunpack.c.l.b16 %v222
    %v758 = vunpack.c.h.b16 %v222
    %v759 = vunpack.c.l.b16 %v223
    %v760 = vunpack.c.h.b16 %v223
    %v761 = vunpack.c.l.b16 %v224
    %v762 = vunpack.c.h.b16 %v224
    %v763 = vunpack.c.l.b16 %v225
    %v764 = vunpack.c.h.b16 %v225
    %v765 = vunpack.c.l.b16 %v226
    %v766 = vunpack.c.h.b16 %v226
    %v767 = vunpack.c.l.b16 %v227
    %v768 = vunpack.c.h.b16 %v227
    %v769 = vunpack.c.l.b16 %v228
    %v770 = vunpack.c.h.b16 %v228
    %v771 = vunpack.c.l.b16 %v229
    %v772 = vunpack.c.h.b16 %v229
    %v773 = vunpack.c.l.b16 %v230
    %v774 = vunpack.c.h.b16 %v230
    %v775 = vunpack.c.l.b16 %v231
    %v776 = vunpack.c.h.b16 %v231
    %v777 = vunpack.c.l.b16 %v232
    %v778 = vunpack.c.h.b16 %v232
    %v779 = vunpack.c.l.b16 %v233
    %v780 = vunpack.c.h.b16 %v233
    %v781 = vunpack.c.l.b16 %v234
    %v782 = vunpack.c.h.b16 %v234
    %v783 = vunpack.c.l.b16 %v235
    %v784 = vunpack.c.h.b16 %v235
    %v785 = vunpack.c.l.b16 %v236
    %v786 = vunpack.c.h.b16 %v236
    %v787 = vunpack.c.l.b16 %v237
    %v788 = vunpack.c.h.b16 %v237
    %v789 = vunpack.c.l.b16 %v238
    %v790 = vunpack.c.h.b16 %v238
    %v791 = vunpack.c.l.b16 %v239
    %v792 = vunpack.c.h.b16 %v239
    %v793 = vunpack.c.l.b16 %v240
    %v794 = vunpack.c.h.b16 %v240
    %v795 = vunpack.c.l.b16 %v241
    %v796 = vunpack.c.h.b16 %v241
    %v797 = vunpack.c.l.b16 %v242
    %v798 = vunpack.c.h.b16 %v242
    %v799 = vunpack.c.l.b16 %v243
    %v800 = vunpack.c.h.b16 %v243
    %v801 = vunpack.c.l.b16 %v244
    %v802 = vunpack.c.h.b16 %v244
    %v803 = vunpack.c.l.b16 %v245
    %v804 = vunpack.c.h.b16 %v245
    %v805 = vunpack.c.l.b16 %v246
    %v806 = vunpack.c.h.b16 %v246
    %v807 = vunpack.c.l.b16 %v247
    %v808 = vunpack.c.h.b16 %v247
    %v809 = vunpack.c.l.b16 %v248
    %v810 = vunpack.c.h.b16 %v248
    %v811 = vunpack.c.l.b16 %v249
    %v812 = vunpack.c.h.b16 %v249
    %v813 = vunpack.c.l.b16 %v250
    %v814 = vunpack.c.h.b16 %v250
    %v815 = vunpack.c.l.b16 %v251
    %v816 = vunpack.c.h.b16 %v251
    %v817 = vunpack.c.l.b16 %v252
    %v818 = vunpack.c.h.b16 %v252
    %v819 = vunpack.c.l.b16 %v253
    %v820 = vunpack.c.h.b16 %v253
    %v821 = vunpack.c.l.b16 %v254
    %v822 = vunpack.c.h.b16 %v254
    %v823 = vunpack.c.l.b16 %v255
    %v824 = vunpack.c.h.b16 %v255
    %v825 = vunpack.c.l.b16 %v256
    %v826 = vunpack.c.h.b16 %v256
    %v827 = vunpack.c.l.b16 %v257
    %v828 = vunpack.c.h.b16 %v257
    %v829 = vunpack.c.l.b16 %v258
    %v830 = vunpack.c.h.b16 %v258
    %v831 = vunpack.c.l.b16 %v259
    %v832 = vunpack.c.h.b16 %v259
    %v833 = vunpack.c.l.b16 %v260
    %v834 = vunpack.c.h.b16 %v260
    %v835 = vunpack.c.l.b16 %v261
    %v836 = vunpack.c.h.b16 %v261
    %v837 = vunpack.c.l.b16 %v262
    %v838 = vunpack.c.h.b16 %v262
    %v839 = vunpack.c.l.b16 %v263
    %v840 = vunpack.c.h.b16 %v263
    %v841 = vunpack.c.l.b16 %v264
    %v842 = vunpack.c.h.b16 %v264
    %v843 = vunpack.c.l.b16 %v265
    %v844 = vunpack.c.h.b16 %v265
    %v845 = vunpack.c.l.b16 %v266
    %v846 = vunpack.c.h.b16 %v266
    %v847 = vunpack.c.l.b16 %v267
    %v848 = vunpack.c.h.b16 %v267
    %v849 = vunpack.c.l.b16 %v268
    %v850 = vunpack.c.h.b16 %v268
    %v851 = vunpack.c.l.b16 %v269
    %v852 = vunpack.c.h.b16 %v269
    %v853 = vunpack.c.l.b16 %v270
    %v854 = vunpack.c.h.b16 %v270
    %v855 = vunpack.c.l.b16 %v271
    %v856 = vunpack.c.h.b16 %v271
    %v857 = vunpack.c.l.b16 %v272
    %v858 = vunpack.c.h.b16 %v272
    %v859 = vunpack.c.l.b16 %v273
    %v860 = vunpack.c.h.b16 %v273
    %v861 = vunpack.c.l.b16 %v274
    %v862 = vunpack.c.h.b16 %v274
    %v863 = vunpack.c.l.b16 %v275
    %v864 = vunpack.c.h.b16 %v275
    %v865 = vunpack.c.l.b16 %v276
    %v866 = vunpack.c.h.b16 %v276
    %v867 = vunpack.c.l.b16 %v277
    %v868 = vunpack.c.h.b16 %v277
    %v869 = vunpack.c.l.b16 %v278
    %v870 = vunpack.c.h.b16 %v278
    %v871 = vunpack.c.l.b16 %v279
    %v872 = vunpack.c.h.b16 %v279
    %v873 = vunpack.c.l.b16 %v280
    %v874 = vunpack.c.h.b16 %v280
    %v875 = vunpack.c.l.b16 %v281
    %v876 = vunpack.c.h.b16 %v281
    %v877 = vunpack.c.l.b16 %v282
    %v878 = vunpack.c.h.b16 %v282
    %v879 = vunpack.c.l.b16 %v283
    %v880 = vunpack.c.h.b16 %v283
    %v881 = vunpack.c.l.b16 %v284
    %v882 = vunpack.c.h.b16 %v284
    %v883 = vunpack.c.l.b16 %v285
    %v884 = vunpack.c.h.b16 %v285
    %v885 = vunpack.c.l.b16 %v286
    %v886 = vunpack.c.h.b16 %v286
    %v887 = vunpack.c.l.b16 %v287
    %v888 = vunpack.c.h.b16 %v287
    %v889 = vunpack.c.l.b16 %v288
    %v890 = vunpack.c.h.b16 %v288
    %v891 = vunpack.c.l.b16 %v289
    %v892 = vunpack.c.h.b16 %v289
    %v893 = vunpack.c.l.b16 %v290
    %v894 = vunpack.c.h.b16 %v290
    %v895 = vunpack.c.l.b16 %v291
    %v896 = vunpack.c.h.b16 %v291
    %v897 = vunpack.c.l.b16 %v292
    %v898 = vunpack.c.h.b16 %v292
    %v899 = vunpack.c.l.b16 %v293
    %v900 = vunpack.c.h.b16 %v293
    %v901 = vunpack.c.l.b16 %v294
    %v902 = vunpack.c.h.b16 %v294
    %v903 = vunpack.c.l.b16 %v295
    %v904 = vunpack.c.h.b16 %v295
    %v905 = vunpack.c.l.b16 %v296
    %v906 = vunpack.c.h.b16 %v296
    %v907 = vpack.c.b16 %v519, %v515
    %v908 = vpack.c.b16 %v520, %v516
    %v909 = vpack.c.b16 %v521, %v517
    %v910 = vpack.c.b16 %v522, %v518
    %v911 = vpack.c.b16 %v527, %v523
    %v912 = vpack.c.b16 %v528, %v524
    %v913 = vpack.c.b16 %v529, %v525
    %v914 = vpack.c.b16 %v530, %v526
    %v915 = vpack.c.b16 %v535, %v531
    %v916 = vpack.c.b16 %v536, %v532
    %v917 = vpack.c.b16 %v537, %v533
    %v918 = vpack.c.b16 %v538, %v534
    %v919 = vpack.c.b16 %v543, %v539
    %v920 = vpack.c.b16 %v544, %v540
    %v921 = vpack.c.b16 %v545, %v541
    %v922 = vpack.c.b16 %v546, %v542
    %v923 = vpack.c.b16 %v551, %v547
    %v924 = vpack.c.b16 %v552, %v548
    %v925 = vpack.c.b16 %v553, %v549
    %v926 = vpack.c.b16 %v554, %v550
    %v927 = vpack.c.b16 %v559, %v555
    %v928 = vpack.c.b16 %v560, %v556
    %v929 = vpack.c.b16 %v561, %v557
    %v930 = vpack.c.b16 %v562, %v558
    %v931 = vpack.c.b16 %v567, %v563
    %v932 = vpack.c.b16 %v568, %v564
    %v933 = vpack.c.b16 %v569, %v565
    %v934 = vpack.c.b16 %v570, %v566
    %v935 = vpack.c.b16 %v575, %v571
    %v936 = vpack.c.b16 %v576, %v572
    %v937 = vpack.c.b16 %v577, %v573
    %v938 = vpack.c.b16 %v578, %v574
    %v939 = vpack.c.b16 %v583, %v579
    %v940 = vpack.c.b16 %v584, %v580
    %v941 = vpack.c.b16 %v585, %v581
    %v942 = vpack.c.b16 %v586, %v582
    %v943 = vpack.c.b16 %v591, %v587
    %v944 = vpack.c.b16 %v592, %v588
    %v945 = vpack.c.b16 %v593, %v589
    %v946 = vpack.c.b16 %v594, %v590
    %v947 = vpack.c.b16 %v599, %v595
    %v948 = vpack.c.b16 %v600, %v596
    %v949 = vpack.c.b16 %v601, %v597
    %v950 = vpack.c.b16 %v602, %v598
    %v951 = vpack.c.b16 %v607, %v603
    %v952 = vpack.c.b16 %v608, %v604
    %v953 = vpack.c.b16 %v609, %v605
    %v954 = vpack.c.b16 %v610, %v606
    %v955 = vpack.c.b16 %v615, %v611
    %v956 = vpack.c.b16 %v616, %v612
    %v957 = vpack.c.b16 %v617, %v613
    %v958 = vpack.c.b16 %v618, %v614
    %v959 = vpack.c.b16 %v623, %v619
    %v960 = vpack.c.b16 %v624, %v620
    %v961 = vpack.c.b16 %v625, %v621
    %v962 = vpack.c.b16 %v626, %v622
    %v963 = vpack.c.b16 %v631, %v627
    %v964 = vpack.c.b16 %v632, %v628
    %v965 = vpack.c.b16 %v633, %v629
    %v966 = vpack.c.b16 %v634, %v630
    %v967 = vpack.c.b16 %v639, %v635
    %v968 = vpack.c.b16 %v640, %v636
    %v969 = vpack.c.b16 %v641, %v637
    %v970 = vpack.c.b16 %v642, %v638
    %v971 = vpack.c.b16 %v647, %v643
    %v972 = vpack.c.b16 %v648, %v644
    %v973 = vpack.c.b16 %v649, %v645
    %v974 = vpack.c.b16 %v650, %v646
    %v975 = vpack.c.b16 %v655, %v651
    %v976 = vpack.c.b16 %v656, %v652
    %v977 = vpack.c.b16 %v657, %v653
    %v978 = vpack.c.b16 %v658, %v654
    %v979 = vpack.c.b16 %v663, %v659
    %v980 = vpack.c.b16 %v664, %v660
    %v981 = vpack.c.b16 %v665, %v661
    %v982 = vpack.c.b16 %v666, %v662
    %v983 = vpack.c.b16 %v671, %v667
    %v984 = vpack.c.b16 %v672, %v668
    %v985 = vpack.c.b16 %v673, %v669
    %v986 = vpack.c.b16 %v674, %v670
    %v987 = vpack.c.b16 %v679, %v675
    %v988 = vpack.c.b16 %v680, %v676
    %v989 = vpack.c.b16 %v681, %v677
    %v990 = vpack.c.b16 %v682, %v678
    %v991 = vpack.c.b16 %v687, %v683
    %v992 = vpack.c.b16 %v688, %v684
    %v993 = vpack.c.b16 %v689, %v685
    %v994 = vpack.c.b16 %v690, %v686
    %v995 = vpack.c.b16 %v695, %v691
    %v996 = vpack.c.b16 %v696, %v692
    %v997 = vpack.c.b16 %v697, %v693
    %v998 = vpack.c.b16 %v698, %v694
    %v999 = vpack.c.b16 %v703, %v699
    %v1000 = vpack.c.b16 %v704, %v700
    %v1001 = vpack.c.b16 %v705, %v701
    %v1002 = vpack.c.b16 %v706, %v702
    %v1003 = vpack.c.b16 %v711, %v707
    %v1004 = vpack.c.b16 %v712, %v708
    %v1005 = vpack.c.b16 %v713, %v709
    %v1006 = vpack.c.b16 %v714, %v710
    %v1007 = vpack.c.b16 %v719, %v715
    %v1008 = vpack.c.b16 %v720, %v716
    %v1009 = vpack.c.b16 %v721, %v717
    %v1010 = vpack.c.b16 %v722, %v718
    %v1011 = vpack.c.b16 %v727, %v723
    %v1012 = vpack.c.b16 %v728, %v724
    %v1013 = vpack.c.b16 %v729, %v725
    %v1014 = vpack.c.b16 %v730, %v726
    %v1015 = vpack.c.b16 %v735, %v731
    %v1016 = vpack.c.b16 %v736, %v732
    %v1017 = vpack.c.b16 %v737, %v733
    %v1018 = vpack.c.b16 %v738, %v734
    %v1019 = vpack.c.b16 %v743, %v739
    %v1020 = vpack.c.b16 %v744, %v740
    %v1021 = vpack.c.b16 %v745, %v741
    %v1022 = vpack.c.b16 %v746, %v742
    %v1023 = vpack.c.b16 %v751, %v747
    %v1024 = vpack.c.b16 %v752, %v748
    %v1025 = vpack.c.b16 %v753, %v749
    %v1026 = vpack.c.b16 %v754, %v750
    %v1027 = vpack.c.b16 %v759, %v755
    %v1028 = vpack.c.b16 %v760, %v756
    %v1029 = vpack.c.b16 %v761, %v757
    %v1030 = vpack.c.b16 %v762, %v758
    %v1031 = vpack.c.b16 %v767, %v763
    %v1032 = vpack.c.b16 %v768, %v764
    %v1033 = vpack.c.b16 %v769, %v765
    %v1034 = vpack.c.b16 %v770, %v766
    %v1035 = vpack.c.b16 %v775, %v771
    %v1036 = vpack.c.b16 %v776, %v772
    %v1037 = vpack.c.b16 %v777, %v773
    %v1038 = vpack.c.b16 %v778, %v774
    %v1039 = vpack.c.b16 %v783, %v779
    %v1040 = vpack.c.b16 %v784, %v780
    %v1041 = vpack.c.b16 %v785, %v781
    %v1042 = vpack.c.b16 %v786, %v782
    %v1043 = vpack.c.b16 %v791, %v787
    %v1044 = vpack.c.b16 %v792, %v788
    %v1045 = vpack.c.b16 %v793, %v789
    %v1046 = vpack.c.b16 %v794, %v790
    %v1047 = vpack.c.b16 %v799, %v795
    %v1048 = vpack.c.b16 %v800, %v796
    %v1049 = vpack.c.b16 %v801, %v797
    %v1050 = vpack.c.b16 %v802, %v798
    %v1051 = vpack.c.b16 %v807, %v803
    %v1052 = vpack.c.b16 %v808, %v804
    %v1053 = vpack.c.b16 %v809, %v805
    %v1054 = vpack.c.b16 %v810, %v806
    %v1055 = vpack.c.b16 %v815, %v811
    %v1056 = vpack.c.b16 %v816, %v812
    %v1057 = vpack.c.b16 %v817, %v813
    %v1058 = vpack.c.b16 %v818, %v814
    %v1059 = vpack.c.b16 %v823, %v819
    %v1060 = vpack.c.b16 %v824, %v820
    %v1061 = vpack.c.b16 %v825, %v821
    %v1062 = vpack.c.b16 %v826, %v822
    %v1063 = vpack.c.b16 %v831, %v827
    %v1064 = vpack.c.b16 %v832, %v828
    %v1065 = vpack.c.b16 %v833, %v829
    %v1066 = vpack.c.b16 %v834, %v830
    %v1067 = vpack.c.b16 %v839, %v835
    %v1068 = vpack.c.b16 %v840, %v836
    %v1069 = vpack.c.b16 %v841, %v837
    %v1070 = vpack.c.b16 %v842, %v838
    %v1071 = vpack.c.b16 %v847, %v843
    %v1072 = vpack.c.b16 %v848, %v844
    %v1073 = vpack.c.b16 %v849, %v845
    %v1074 = vpack.c.b16 %v850, %v846
    %v1075 = vpack.c.b16 %v855, %v851
    %v1076 = vpack.c.b16 %v856, %v852
    %v1077 = vpack.c.b16 %v857, %v853
    %v1078 = vpack.c.b16 %v858, %v854
    %v1079 = vpack.c.b16 %v863, %v859
    %v1080 = vpack.c.b16 %v864, %v860
    %v1081 = vpack.c.b16 %v865, %v861
    %v1082 = vpack.c.b16 %v866, %v862
    %v1083 = vpack.c.b16 %v871, %v867
    %v1084 = vpack.c.b16 %v872, %v868
    %v1085 = vpack.c.b16 %v873, %v869
    %v1086 = vpack.c.b16 %v874, %v870
    %v1087 = vpack.c.b16 %v879, %v875
    %v1088 = vpack.c.b16 %v880, %v876
    %v1089 = vpack.c.b16 %v881, %v877
    %v1090 = vpack.c.b16 %v882, %v878
    %v1091 = vpack.c.b16 %v887, %v883
    %v1092 = vpack.c.b16 %v888, %v884
    %v1093 = vpack.c.b16 %v889, %v885
    %v1094 = vpack.c.b16 %v890, %v886
    %v1095 = vpack.c.b16 %v895, %v891
    %v1096 = vpack.c.b16 %v896, %v892
    %v1097 = vpack.c.b16 %v897, %v893
    %v1098 = vpack.c.b16 %v898, %v894
    %v1099 = vpack.c.b16 %v903, %v899
    %v1100 = vpack.c.b16 %v904, %v900
    %v1101 = vpack.c.b16 %v905, %v901
    %v1102 = vpack.c.b16 %v906, %v902
    %vm1299 = vcmask 130048
    %v1301 = vsel %vm1299, %v100, 0
    %1303 = vmatprep.subr.bf16.mxu0 %v908
    %1304 = vmatpush1.bf16.msra.mxu0 %v907
    %1305 = vmatprep.subr.bf16.mxu0 %v912
    %1306 = vmatpush1.bf16.msra.mxu0 %v911
    %1307 = vmatprep.subr.bf16.mxu0 %v916
    %1308 = vmatpush1.bf16.msra.mxu0 %v915
    %1309 = vmatprep.subr.bf16.mxu0 %v920
    %1310 = vmatpush1.bf16.msra.mxu0 %v919
    %1311 = vmatprep.subr.bf16.mxu0 %v924
    %1312 = vmatpush1.bf16.msra.mxu0 %v923
    %1313 = vmatprep.subr.bf16.mxu0 %v928
    %1314 = vmatpush1.bf16.msra.mxu0 %v927
    %1315 = vmatprep.subr.bf16.mxu0 %v932
    %1316 = vmatpush1.bf16.msra.mxu0 %v931
    %1317 = vmatprep.subr.bf16.mxu0 %v936
    %1318 = vmatpush1.bf16.msra.mxu0 %v935
    %1319 = vmatprep.subr.bf16.mxu0 %v940
    %1320 = vmatpush1.bf16.msra.mxu0 %v939
    %1321 = vmatprep.subr.bf16.mxu0 %v944
    %1322 = vmatpush1.bf16.msra.mxu0 %v943
    %1323 = vmatprep.subr.bf16.mxu0 %v948
    %1324 = vmatpush1.bf16.msra.mxu0 %v947
    %1325 = vmatprep.subr.bf16.mxu0 %v952
    %1326 = vmatpush1.bf16.msra.mxu0 %v951
    %1327 = vmatprep.subr.bf16.mxu0 %v956
    %1328 = vmatpush1.bf16.msra.mxu0 %v955
    %1329 = vmatprep.subr.bf16.mxu0 %v960
    %1330 = vmatpush1.bf16.msra.mxu0 %v959
    %1331 = vmatprep.subr.bf16.mxu0 %v964
    %1332 = vmatpush1.bf16.msra.mxu0 %v963
    %1333 = vmatprep.subr.bf16.mxu0 %v968
    %1334 = vmatpush1.bf16.msra.mxu0 %v967
    %1335 = vmatprep.mubr.bf16.mxu0 %v95
    %1336 = vmatmul.mubr.bf16.gmra.mrb[0].mxu0 %v94
    %v1337 = vpop.f32.mrb[0].mxu0
    %v1338 = vadd.f32 %v302, %v1337
    %v1339 = vpop.f32.mrb[0].mxu0
    %v1340 = vadd.f32 %v306, %v1339
    %v1341 = vpop.f32.mrb[0].mxu0
    %v1342 = vpop.f32.mrb[0].mxu0
    %1343 = vdwg.mxu0
    %1344 = vmatprep.subr.bf16.mxu0 %v972
    %1345 = vmatpush1.bf16.msra.mxu0 %v971
    %1346 = vmatprep.subr.bf16.mxu0 %v976
    %1347 = vmatpush1.bf16.msra.mxu0 %v975
    %1348 = vmatprep.subr.bf16.mxu0 %v980
    %1349 = vmatpush1.bf16.msra.mxu0 %v979
    %1350 = vmatprep.subr.bf16.mxu0 %v984
    %1351 = vmatpush1.bf16.msra.mxu0 %v983
    %1352 = vmatprep.subr.bf16.mxu0 %v988
    %1353 = vmatpush1.bf16.msra.mxu0 %v987
    %1354 = vmatprep.subr.bf16.mxu0 %v992
    %1355 = vmatpush1.bf16.msra.mxu0 %v991
    %1356 = vmatprep.subr.bf16.mxu0 %v996
    %1357 = vmatpush1.bf16.msra.mxu0 %v995
    %1358 = vmatprep.subr.bf16.mxu0 %v1000
    %1359 = vmatpush1.bf16.msra.mxu0 %v999
    %1360 = vmatprep.subr.bf16.mxu0 %v1004
    %1361 = vmatpush1.bf16.msra.mxu0 %v1003
    %1362 = vmatprep.subr.bf16.mxu0 %v1008
    %1363 = vmatpush1.bf16.msra.mxu0 %v1007
    %1364 = vmatprep.subr.bf16.mxu0 %v1012
    %1365 = vmatpush1.bf16.msra.mxu0 %v1011
    %1366 = vmatprep.subr.bf16.mxu0 %v1016
    %1367 = vmatpush1.bf16.msra.mxu0 %v1015
    %1368 = vmatprep.subr.bf16.mxu0 %v1020
    %1369 = vmatpush1.bf16.msra.mxu0 %v1019
    %1370 = vmatprep.subr.bf16.mxu0 %v1024
    %1371 = vmatpush1.bf16.msra.mxu0 %v1023
    %1372 = vmatprep.subr.bf16.mxu0 %v1028
    %1373 = vmatpush1.bf16.msra.mxu0 %v1027
    %1374 = vmatprep.subr.bf16.mxu0 %v1032
    %1375 = vmatpush1.bf16.msra.mxu0 %v1031
    %1376 = vmatprep.mubr.bf16.mxu0 %v97
    %1377 = vmatmul.mubr.bf16.gmra.mrb[0].mxu0 %v96
    %v1378 = vpop.f32.mrb[0].mxu0
    %v1379 = vadd.f32 %v1338, %v1378
    %v1380 = vpop.f32.mrb[0].mxu0
    %v1381 = vadd.f32 %v1340, %v1380
    %v1382 = vpop.f32.mrb[0].mxu0
    %v1383 = vpop.f32.mrb[0].mxu0
    %1384 = vdwg.mxu0
    %1385 = vmatprep.subr.bf16.mxu0 %v1036
    %1386 = vmatpush1.bf16.msra.mxu0 %v1035
    %1387 = vmatprep.subr.bf16.mxu0 %v1040
    %1388 = vmatpush1.bf16.msra.mxu0 %v1039
    %1389 = vmatprep.subr.bf16.mxu0 %v1044
    %1390 = vmatpush1.bf16.msra.mxu0 %v1043
    %1391 = vmatprep.subr.bf16.mxu0 %v1048
    %1392 = vmatpush1.bf16.msra.mxu0 %v1047
    %1393 = vmatprep.subr.bf16.mxu0 %v1052
    %1394 = vmatpush1.bf16.msra.mxu0 %v1051
    %1395 = vmatprep.subr.bf16.mxu0 %v1056
    %1396 = vmatpush1.bf16.msra.mxu0 %v1055
    %1397 = vmatprep.subr.bf16.mxu0 %v1060
    %1398 = vmatpush1.bf16.msra.mxu0 %v1059
    %1399 = vmatprep.subr.bf16.mxu0 %v1064
    %1400 = vmatpush1.bf16.msra.mxu0 %v1063
    %1401 = vmatprep.subr.bf16.mxu0 %v1068
    %1402 = vmatpush1.bf16.msra.mxu0 %v1067
    %1403 = vmatprep.subr.bf16.mxu0 %v1072
    %1404 = vmatpush1.bf16.msra.mxu0 %v1071
    %1405 = vmatprep.subr.bf16.mxu0 %v1076
    %1406 = vmatpush1.bf16.msra.mxu0 %v1075
    %1407 = vmatprep.subr.bf16.mxu0 %v1080
    %1408 = vmatpush1.bf16.msra.mxu0 %v1079
    %1409 = vmatprep.subr.bf16.mxu0 %v1084
    %1410 = vmatpush1.bf16.msra.mxu0 %v1083
    %1411 = vmatprep.subr.bf16.mxu0 %v1088
    %1412 = vmatpush1.bf16.msra.mxu0 %v1087
    %1413 = vmatprep.subr.bf16.mxu0 %v1092
    %1414 = vmatpush1.bf16.msra.mxu0 %v1091
    %1415 = vmatprep.subr.bf16.mxu0 %v1096
    %1416 = vmatpush1.bf16.msra.mxu0 %v1095
    %1417 = vmatprep.mubr.bf16.mxu0 %v99
    %1418 = vmatmul.mubr.bf16.gmra.mrb[0].mxu0 %v98
    %v1419 = vpop.f32.mrb[0].mxu0
    %v1420 = vadd.f32 %v1379, %v1419
    %v1421 = vpop.f32.mrb[0].mxu0
    %v1422 = vadd.f32 %v1381, %v1421
    %v1423 = vpop.f32.mrb[0].mxu0
    %v1424 = vpop.f32.mrb[0].mxu0
    %1425 = vdwg.mxu0
    %1426 = vmatprep.subr.bf16.mxu0 %v1100
    %1427 = vmatpush1.bf16.msra.mxu0 %v1099
    %1428 = vmatprep.subr.bf16.mxu0 0
    %1429 = vmatpush1.bf16.msra.mxu0 0
    %1430 = vmatprep.subr.bf16.mxu0 0
    %1431 = vmatpush1.bf16.msra.mxu0 0
    %1432 = vmatprep.subr.bf16.mxu0 0
    %1433 = vmatpush1.bf16.msra.mxu0 0
    %1434 = vmatprep.subr.bf16.mxu0 0
    %1435 = vmatpush1.bf16.msra.mxu0 0
    %1436 = vmatprep.subr.bf16.mxu0 0
    %1437 = vmatpush1.bf16.msra.mxu0 0
    %1438 = vmatprep.subr.bf16.mxu0 0
    %1439 = vmatpush1.bf16.msra.mxu0 0
    %1440 = vmatprep.subr.bf16.mxu0 0
    %1441 = vmatpush1.bf16.msra.mxu0 0
    %1442 = vmatprep.subr.bf16.mxu0 0
    %1443 = vmatpush1.bf16.msra.mxu0 0
    %1444 = vmatprep.subr.bf16.mxu0 0
    %1445 = vmatpush1.bf16.msra.mxu0 0
    %1446 = vmatprep.subr.bf16.mxu0 0
    %1447 = vmatpush1.bf16.msra.mxu0 0
    %1448 = vmatprep.subr.bf16.mxu0 0
    %1449 = vmatpush1.bf16.msra.mxu0 0
    %1450 = vmatprep.subr.bf16.mxu0 0
    %1451 = vmatpush1.bf16.msra.mxu0 0
    %1452 = vmatprep.subr.bf16.mxu0 0
    %1453 = vmatpush1.bf16.msra.mxu0 0
    %1454 = vmatprep.subr.bf16.mxu0 0
    %1455 = vmatpush1.bf16.msra.mxu0 0
    %1456 = vmatprep.subr.bf16.mxu0 0
    %1457 = vmatpush1.bf16.msra.mxu0 0
    %1458 = vmatprep.mubr.bf16.mxu0 0
    %1459 = vmatmul.mubr.bf16.gmra.mrb[0].mxu0 %v1301
    %v1460 = vpop.f32.mrb[0].mxu0
    %v1461 = vadd.f32 %v1420, %v1460
    %v1462 = vpop.f32.mrb[0].mxu0
    %v1463 = vadd.f32 %v1422, %v1462
    %v1464 = vpop.f32.mrb[0].mxu0
    %v1465 = vpop.f32.mrb[0].mxu0
    %1466 = vdwg.mxu0
    %1467 = vmatprep.subr.bf16.mxu0 %v910
    %1468 = vmatpush1.bf16.msra.mxu0 %v909
    %1469 = vmatprep.subr.bf16.mxu0 %v914
    %1470 = vmatpush1.bf16.msra.mxu0 %v913
    %1471 = vmatprep.subr.bf16.mxu0 %v918
    %1472 = vmatpush1.bf16.msra.mxu0 %v917
    %1473 = vmatprep.subr.bf16.mxu0 %v922
    %1474 = vmatpush1.bf16.msra.mxu0 %v921
    %1475 = vmatprep.subr.bf16.mxu0 %v926
    %1476 = vmatpush1.bf16.msra.mxu0 %v925
    %1477 = vmatprep.subr.bf16.mxu0 %v930
    %1478 = vmatpush1.bf16.msra.mxu0 %v929
    %1479 = vmatprep.subr.bf16.mxu0 %v934
    %1480 = vmatpush1.bf16.msra.mxu0 %v933
    %1481 = vmatprep.subr.bf16.mxu0 %v938
    %1482 = vmatpush1.bf16.msra.mxu0 %v937
    %1483 = vmatprep.subr.bf16.mxu0 %v942
    %1484 = vmatpush1.bf16.msra.mxu0 %v941
    %1485 = vmatprep.subr.bf16.mxu0 %v946
    %1486 = vmatpush1.bf16.msra.mxu0 %v945
    %1487 = vmatprep.subr.bf16.mxu0 %v950
    %1488 = vmatpush1.bf16.msra.mxu0 %v949
    %1489 = vmatprep.subr.bf16.mxu0 %v954
    %1490 = vmatpush1.bf16.msra.mxu0 %v953
    %1491 = vmatprep.subr.bf16.mxu0 %v958
    %1492 = vmatpush1.bf16.msra.mxu0 %v957
    %1493 = vmatprep.subr.bf16.mxu0 %v962
    %1494 = vmatpush1.bf16.msra.mxu0 %v961
    %1495 = vmatprep.subr.bf16.mxu0 %v966
    %1496 = vmatpush1.bf16.msra.mxu0 %v965
    %1497 = vmatprep.subr.bf16.mxu0 %v970
    %1498 = vmatpush1.bf16.msra.mxu0 %v969
    %1499 = vmatprep.mubr.bf16.mxu0 %v95
    %1500 = vmatmul.mubr.bf16.gmra.mrb[0].mxu0 %v94
    %v1501 = vpop.f32.mrb[0].mxu0
    %v1502 = vadd.f32 %v310, %v1501
    %v1503 = vpop.f32.mrb[0].mxu0
    %v1504 = vadd.f32 %v314, %v1503
    %v1505 = vpop.f32.mrb[0].mxu0
    %v1506 = vpop.f32.mrb[0].mxu0
    %1507 = vdwg.mxu0
    %1508 = vmatprep.subr.bf16.mxu0 %v974
    %1509 = vmatpush1.bf16.msra.mxu0 %v973
    %1510 = vmatprep.subr.bf16.mxu0 %v978
    %1511 = vmatpush1.bf16.msra.mxu0 %v977
    %1512 = vmatprep.subr.bf16.mxu0 %v982
    %1513 = vmatpush1.bf16.msra.mxu0 %v981
    %1514 = vmatprep.subr.bf16.mxu0 %v986
    %1515 = vmatpush1.bf16.msra.mxu0 %v985
    %1516 = vmatprep.subr.bf16.mxu0 %v990
    %1517 = vmatpush1.bf16.msra.mxu0 %v989
    %1518 = vmatprep.subr.bf16.mxu0 %v994
    %1519 = vmatpush1.bf16.msra.mxu0 %v993
    %1520 = vmatprep.subr.bf16.mxu0 %v998
    %1521 = vmatpush1.bf16.msra.mxu0 %v997
    %1522 = vmatprep.subr.bf16.mxu0 %v1002
    %1523 = vmatpush1.bf16.msra.mxu0 %v1001
    %1524 = vmatprep.subr.bf16.mxu0 %v1006
    %1525 = vmatpush1.bf16.msra.mxu0 %v1005
    %1526 = vmatprep.subr.bf16.mxu0 %v1010
    %1527 = vmatpush1.bf16.msra.mxu0 %v1009
    %1528 = vmatprep.subr.bf16.mxu0 %v1014
    %1529 = vmatpush1.bf16.msra.mxu0 %v1013
    %1530 = vmatprep.subr.bf16.mxu0 %v1018
    %1531 = vmatpush1.bf16.msra.mxu0 %v1017
    %1532 = vmatprep.subr.bf16.mxu0 %v1022
    %1533 = vmatpush1.bf16.msra.mxu0 %v1021
    %1534 = vmatprep.subr.bf16.mxu0 %v1026
    %1535 = vmatpush1.bf16.msra.mxu0 %v1025
    %1536 = vmatprep.subr.bf16.mxu0 %v1030
    %1537 = vmatpush1.bf16.msra.mxu0 %v1029
    %1538 = vmatprep.subr.bf16.mxu0 %v1034
    %1539 = vmatpush1.bf16.msra.mxu0 %v1033
    %1540 = vmatprep.mubr.bf16.mxu0 %v97
    %1541 = vmatmul.mubr.bf16.gmra.mrb[0].mxu0 %v96
    %v1542 = vpop.f32.mrb[0].mxu0
    %v1543 = vadd.f32 %v1502, %v1542
    %v1544 = vpop.f32.mrb[0].mxu0
    %v1545 = vadd.f32 %v1504, %v1544
    %v1546 = vpop.f32.mrb[0].mxu0
    %v1547 = vpop.f32.mrb[0].mxu0
    %1548 = vdwg.mxu0
    %1549 = vmatprep.subr.bf16.mxu0 %v1038
    %1550 = vmatpush1.bf16.msra.mxu0 %v1037
    %1551 = vmatprep.subr.bf16.mxu0 %v1042
    %1552 = vmatpush1.bf16.msra.mxu0 %v1041
    %1553 = vmatprep.subr.bf16.mxu0 %v1046
    %1554 = vmatpush1.bf16.msra.mxu0 %v1045
    %1555 = vmatprep.subr.bf16.mxu0 %v1050
    %1556 = vmatpush1.bf16.msra.mxu0 %v1049
    %1557 = vmatprep.subr.bf16.mxu0 %v1054
    %1558 = vmatpush1.bf16.msra.mxu0 %v1053
    %1559 = vmatprep.subr.bf16.mxu0 %v1058
    %1560 = vmatpush1.bf16.msra.mxu0 %v1057
    %1561 = vmatprep.subr.bf16.mxu0 %v1062
    %1562 = vmatpush1.bf16.msra.mxu0 %v1061
    %1563 = vmatprep.subr.bf16.mxu0 %v1066
    %1564 = vmatpush1.bf16.msra.mxu0 %v1065
    %1565 = vmatprep.subr.bf16.mxu0 %v1070
    %1566 = vmatpush1.bf16.msra.mxu0 %v1069
    %1567 = vmatprep.subr.bf16.mxu0 %v1074
    %1568 = vmatpush1.bf16.msra.mxu0 %v1073
    %1569 = vmatprep.subr.bf16.mxu0 %v1078
    %1570 = vmatpush1.bf16.msra.mxu0 %v1077
    %1571 = vmatprep.subr.bf16.mxu0 %v1082
    %1572 = vmatpush1.bf16.msra.mxu0 %v1081
    %1573 = vmatprep.subr.bf16.mxu0 %v1086
    %1574 = vmatpush1.bf16.msra.mxu0 %v1085
    %1575 = vmatprep.subr.bf16.mxu0 %v1090
    %1576 = vmatpush1.bf16.msra.mxu0 %v1089
    %1577 = vmatprep.subr.bf16.mxu0 %v1094
    %1578 = vmatpush1.bf16.msra.mxu0 %v1093
    %1579 = vmatprep.subr.bf16.mxu0 %v1098
    %1580 = vmatpush1.bf16.msra.mxu0 %v1097
    %1581 = vmatprep.mubr.bf16.mxu0 %v99
    %1582 = vmatmul.mubr.bf16.gmra.mrb[0].mxu0 %v98
    %v1583 = vpop.f32.mrb[0].mxu0
    %v1584 = vadd.f32 %v1543, %v1583
    %v1585 = vpop.f32.mrb[0].mxu0
    %v1586 = vadd.f32 %v1545, %v1585
    %v1587 = vpop.f32.mrb[0].mxu0
    %v1588 = vpop.f32.mrb[0].mxu0
    %1589 = vdwg.mxu0
    %1590 = vmatprep.subr.bf16.mxu0 %v1102
    %1591 = vmatpush1.bf16.msra.mxu0 %v1101
    %1592 = vmatprep.subr.bf16.mxu0 0
    %1593 = vmatpush1.bf16.msra.mxu0 0
    %1594 = vmatprep.subr.bf16.mxu0 0
    %1595 = vmatpush1.bf16.msra.mxu0 0
    %1596 = vmatprep.subr.bf16.mxu0 0
    %1597 = vmatpush1.bf16.msra.mxu0 0
    %1598 = vmatprep.subr.bf16.mxu0 0
    %1599 = vmatpush1.bf16.msra.mxu0 0
    %1600 = vmatprep.subr.bf16.mxu0 0
    %1601 = vmatpush1.bf16.msra.mxu0 0
    %1602 = vmatprep.subr.bf16.mxu0 0
    %1603 = vmatpush1.bf16.msra.mxu0 0
    %1604 = vmatprep.subr.bf16.mxu0 0
    %1605 = vmatpush1.bf16.msra.mxu0 0
    %1606 = vmatprep.subr.bf16.mxu0 0
    %1607 = vmatpush1.bf16.msra.mxu0 0
    %1608 = vmatprep.subr.bf16.mxu0 0
    %1609 = vmatpush1.bf16.msra.mxu0 0
    %1610 = vmatprep.subr.bf16.mxu0 0
    %1611 = vmatpush1.bf16.msra.mxu0 0
    %1612 = vmatprep.subr.bf16.mxu0 0
    %1613 = vmatpush1.bf16.msra.mxu0 0
    %1614 = vmatprep.subr.bf16.mxu0 0
    %1615 = vmatpush1.bf16.msra.mxu0 0
    %1616 = vmatprep.subr.bf16.mxu0 0
    %1617 = vmatpush1.bf16.msra.mxu0 0
    %1618 = vmatprep.subr.bf16.mxu0 0
    %1619 = vmatpush1.bf16.msra.mxu0 0
    %1620 = vmatprep.subr.bf16.mxu0 0
    %1621 = vmatpush1.bf16.msra.mxu0 0
    %1622 = vmatprep.mubr.bf16.mxu0 0
    %1623 = vmatmul.mubr.bf16.gmra.mrb[0].mxu0 %v1301
    %v1624 = vpop.f32.mrb[0].mxu0
    %v1625 = vadd.f32 %v1584, %v1624
    %v1626 = vpop.f32.mrb[0].mxu0
    %v1627 = vadd.f32 %v1586, %v1626
    %v1628 = vpop.f32.mrb[0].mxu0
    %v1629 = vpop.f32.mrb[0].mxu0
    %1630 = vdwg.mxu0
    %v1631 = vmax.f32 %v1461, 0.0
    %v1632 = vmax.f32 %v1463, 0.0
    %v1633 = vmax.f32 %v1625, 0.0
    %v1634 = vmax.f32 %v1627, 0.0
    %v1635 = vpack.c.bf16 %v1631, %v1631
    %v1636 = vpack.c.bf16 %v1632, %v1632
    %v1637 = vpack.c.bf16 %v1633, %v1633
    %v1638 = vpack.c.bf16 %v1634, %v1634
    %v1639 = vld [vmem:[#allocation7] sm:$0xff]
    %v1640 = vld [vmem:[#allocation7 + $0x8] sm:$0xff]
    %v1641 = vld [vmem:[#allocation7 + $0x10] sm:$0xff]
    %v1642 = vld [vmem:[#allocation7 + $0x18] sm:$0xff]
    %v1643 = vld [vmem:[#allocation7 + $0x20] sm:$0xff]
    %v1644 = vld [vmem:[#allocation7 + $0x28] sm:$0xff]
    %v1645 = vld [vmem:[#allocation7 + $0x30] sm:$0xff]
    %v1646 = vld [vmem:[#allocation7 + $0x38] sm:$0xff]
    %v1647 = vld [vmem:[#allocation7 + $0x40] sm:$0xff]
    %v1648 = vld [vmem:[#allocation7 + $0x48] sm:$0xff]
    %v1649 = vld [vmem:[#allocation7 + $0x50] sm:$0xff]
    %v1650 = vld [vmem:[#allocation7 + $0x58] sm:$0xff]
    %v1651 = vld [vmem:[#allocation7 + $0x60] sm:$0xff]
    %v1652 = vld [vmem:[#allocation7 + $0x68] sm:$0xff]
    %v1653 = vld [vmem:[#allocation7 + $0x70] sm:$0xff]
    %v1654 = vld [vmem:[#allocation7 + $0x78] sm:$0xff]
    %v1655 = vld [vmem:[#allocation7 + $0x80] sm:$0xff]
    %v1656 = vld [vmem:[#allocation7 + $0x88] sm:$0xff]
    %v1657 = vld [vmem:[#allocation7 + $0x90] sm:$0xff]
    %v1658 = vld [vmem:[#allocation7 + $0x98] sm:$0xff]
    %v1659 = vld [vmem:[#allocation7 + $0xa0] sm:$0xff]
    %v1660 = vld [vmem:[#allocation7 + $0xa8] sm:$0xff]
    %v1661 = vld [vmem:[#allocation7 + $0xb0] sm:$0xff]
    %v1662 = vld [vmem:[#allocation7 + $0xb8] sm:$0xff]
    %v1663 = vld [vmem:[#allocation7 + $0xc0] sm:$0xff]
    %v1664 = vld [vmem:[#allocation7 + $0xc8] sm:$0xff]
    %v1665 = vld [vmem:[#allocation7 + $0xd0] sm:$0xff]
    %v1666 = vld [vmem:[#allocation7 + $0xd8] sm:$0xff]
    %v1667 = vld [vmem:[#allocation7 + $0xe0] sm:$0xff]
    %v1668 = vld [vmem:[#allocation7 + $0xe8] sm:$0xff]
    %v1669 = vld [vmem:[#allocation7 + $0xf0] sm:$0xff]
    %v1670 = vld [vmem:[#allocation7 + $0xf8] sm:$0xff]
    %v1671 = vld [vmem:[#allocation7 + $0x100] sm:$0xff]
    %v1672 = vld [vmem:[#allocation7 + $0x108] sm:$0xff]
    %v1673 = vld [vmem:[#allocation7 + $0x110] sm:$0xff]
    %v1674 = vld [vmem:[#allocation7 + $0x118] sm:$0xff]
    %v1675 = vld [vmem:[#allocation7 + $0x120] sm:$0xff]
    %v1676 = vld [vmem:[#allocation7 + $0x128] sm:$0xff]
    %v1677 = vld [vmem:[#allocation7 + $0x130] sm:$0xff]
    %v1678 = vld [vmem:[#allocation7 + $0x138] sm:$0xff]
    %v1679 = vld [vmem:[#allocation7 + $0x140] sm:$0xff]
    %v1680 = vld [vmem:[#allocation7 + $0x148] sm:$0xff]
    %v1681 = vld [vmem:[#allocation7 + $0x150] sm:$0xff]
    %v1682 = vld [vmem:[#allocation7 + $0x158] sm:$0xff]
    %v1683 = vld [vmem:[#allocation7 + $0x160] sm:$0xff]
    %v1684 = vld [vmem:[#allocation7 + $0x168] sm:$0xff]
    %v1685 = vld [vmem:[#allocation7 + $0x170] sm:$0xff]
    %v1686 = vld [vmem:[#allocation7 + $0x178] sm:$0xff]
    %v1687 = vld [vmem:[#allocation7 + $0x180] sm:$0xff]
    %v1688 = vld [vmem:[#allocation7 + $0x188] sm:$0xff]
    %v1689 = vld [vmem:[#allocation7 + $0x190] sm:$0xff]
    %v1690 = vld [vmem:[#allocation7 + $0x198] sm:$0xff]
    %v1691 = vld [vmem:[#allocation7 + $0x1a0] sm:$0xff]
    %v1692 = vld [vmem:[#allocation7 + $0x1a8] sm:$0xff]
    %v1693 = vld [vmem:[#allocation7 + $0x1b0] sm:$0xff]
    %v1694 = vld [vmem:[#allocation7 + $0x1b8] sm:$0xff]
    %v1695 = vld [vmem:[#allocation7 + $0x1c0] sm:$0xff]
    %v1696 = vld [vmem:[#allocation7 + $0x1c8] sm:$0xff]
    %v1697 = vld [vmem:[#allocation7 + $0x1d0] sm:$0xff]
    %v1698 = vld [vmem:[#allocation7 + $0x1d8] sm:$0xff]
    %v1699 = vld [vmem:[#allocation7 + $0x1e0] sm:$0xff]
    %v1700 = vld [vmem:[#allocation7 + $0x1e8] sm:$0xff]
    %v1701 = vld [vmem:[#allocation7 + $0x1f0] sm:$0xff]
    %v1702 = vld [vmem:[#allocation7 + $0x1f8] sm:$0xff]
    %v1703 = vld [vmem:[#allocation7 + $0x200] sm:$0xff]
    %v1704 = vld [vmem:[#allocation7 + $0x208] sm:$0xff]
    %v1705 = vld [vmem:[#allocation7 + $0x210] sm:$0xff]
    %v1706 = vld [vmem:[#allocation7 + $0x218] sm:$0xff]
    %v1707 = vld [vmem:[#allocation7 + $0x220] sm:$0xff]
    %v1708 = vld [vmem:[#allocation7 + $0x228] sm:$0xff]
    %v1709 = vld [vmem:[#allocation7 + $0x230] sm:$0xff]
    %v1710 = vld [vmem:[#allocation7 + $0x238] sm:$0xff]
    %v1711 = vld [vmem:[#allocation7 + $0x240] sm:$0xff]
    %v1712 = vld [vmem:[#allocation7 + $0x248] sm:$0xff]
    %v1713 = vld [vmem:[#allocation7 + $0x250] sm:$0xff]
    %v1714 = vld [vmem:[#allocation7 + $0x258] sm:$0xff]
    %v1715 = vld [vmem:[#allocation7 + $0x260] sm:$0xff]
    %v1716 = vld [vmem:[#allocation7 + $0x268] sm:$0xff]
    %v1717 = vld [vmem:[#allocation7 + $0x270] sm:$0xff]
    %v1718 = vld [vmem:[#allocation7 + $0x278] sm:$0xff]
    %v1719 = vld [vmem:[#allocation7 + $0x280] sm:$0xff]
    %v1720 = vld [vmem:[#allocation7 + $0x288] sm:$0xff]
    %v1721 = vld [vmem:[#allocation7 + $0x290] sm:$0xff]
    %v1722 = vld [vmem:[#allocation7 + $0x298] sm:$0xff]
    %v1723 = vld [vmem:[#allocation7 + $0x2a0] sm:$0xff]
    %v1724 = vld [vmem:[#allocation7 + $0x2a8] sm:$0xff]
    %v1725 = vld [vmem:[#allocation7 + $0x2b0] sm:$0xff]
    %v1726 = vld [vmem:[#allocation7 + $0x2b8] sm:$0xff]
    %v1727 = vld [vmem:[#allocation7 + $0x2c0] sm:$0xff]
    %v1728 = vld [vmem:[#allocation7 + $0x2c8] sm:$0xff]
    %v1729 = vld [vmem:[#allocation7 + $0x2d0] sm:$0xff]
    %v1730 = vld [vmem:[#allocation7 + $0x2d8] sm:$0xff]
    %v1731 = vld [vmem:[#allocation7 + $0x2e0] sm:$0xff]
    %v1732 = vld [vmem:[#allocation7 + $0x2e8] sm:$0xff]
    %v1733 = vld [vmem:[#allocation7 + $0x2f0] sm:$0xff]
    %v1734 = vld [vmem:[#allocation7 + $0x2f8] sm:$0xff]
    %v1735 = vld [vmem:[#allocation7 + $0x300] sm:$0xff]
    %v1736 = vld [vmem:[#allocation7 + $0x308] sm:$0xff]
    %v1737 = vld [vmem:[#allocation7 + $0x310] sm:$0xff]
    %v1738 = vld [vmem:[#allocation7 + $0x318] sm:$0xff]
    %v1739 = vld [vmem:[#allocation7 + $0x320] sm:$0xff]
    %v1740 = vld [vmem:[#allocation7 + $0x328] sm:$0xff]
    %v1741 = vld [vmem:[#allocation7 + $0x330] sm:$0xff]
    %v1742 = vld [vmem:[#allocation7 + $0x338] sm:$0xff]
    %v1743 = vld [vmem:[#allocation7 + $0x340] sm:$0xff]
    %v1744 = vld [vmem:[#allocation7 + $0x348] sm:$0xff]
    %v1745 = vld [vmem:[#allocation7 + $0x350] sm:$0xff]
    %v1746 = vld [vmem:[#allocation7 + $0x358] sm:$0xff]
    %v1747 = vld [vmem:[#allocation7 + $0x360] sm:$0xff]
    %v1748 = vld [vmem:[#allocation7 + $0x368] sm:$0xff]
    %v1749 = vld [vmem:[#allocation7 + $0x370] sm:$0xff]
    %v1750 = vld [vmem:[#allocation7 + $0x378] sm:$0xff]
    %v1751 = vld [vmem:[#allocation7 + $0x380] sm:$0xff]
    %v1752 = vld [vmem:[#allocation7 + $0x388] sm:$0xff]
    %v1753 = vld [vmem:[#allocation7 + $0x390] sm:$0xff]
    %v1754 = vld [vmem:[#allocation7 + $0x398] sm:$0xff]
    %v1755 = vld [vmem:[#allocation7 + $0x3a0] sm:$0xff]
    %v1756 = vld [vmem:[#allocation7 + $0x3a8] sm:$0xff]
    %v1757 = vld [vmem:[#allocation7 + $0x3b0] sm:$0xff]
    %v1758 = vld [vmem:[#allocation7 + $0x3b8] sm:$0xff]
    %v1759 = vld [vmem:[#allocation7 + $0x3c0] sm:$0xff]
    %v1760 = vld [vmem:[#allocation7 + $0x3c8] sm:$0xff]
    %v1761 = vld [vmem:[#allocation7 + $0x3d0] sm:$0xff]
    %v1762 = vld [vmem:[#allocation7 + $0x3d8] sm:$0xff]
    %v1763 = vld [vmem:[#allocation7 + $0x3e0] sm:$0xff]
    %v1764 = vld [vmem:[#allocation7 + $0x3e8] sm:$0xff]
    %v1765 = vld [vmem:[#allocation7 + $0x3f0] sm:$0xff]
    %v1766 = vld [vmem:[#allocation7 + $0x3f8] sm:$0xff]
    %v1767 = vld [vmem:[%s4] sm:$0xf]
    %v1769 = vlaneseq
    %v1770 = vshrl.u32 %v1769, 7
    %v1771 = vsub.s32 0, %v1770
    %v1772 = vrot.slane %v1767, %v1771
    %v1773 = vlaneseq
    %v1774 = vshrl.u32 %v1773, 7
    %v1775 = vsub.s32 1, %v1774
    %v1776 = vrot.slane %v1767, %v1775
    %v1777 = vlaneseq
    %v1778 = vshrl.u32 %v1777, 7
    %v1779 = vsub.s32 2, %v1778
    %v1780 = vrot.slane %v1767, %v1779
    %v1781 = vlaneseq
    %v1782 = vshrl.u32 %v1781, 7
    %v1783 = vsub.s32 3, %v1782
    %v1784 = vrot.slane %v1767, %v1783
    %v1917 = vunpack.c.l.b16 %v1639
    %v1918 = vunpack.c.h.b16 %v1639
    %v1919 = vunpack.c.l.b16 %v1640
    %v1920 = vunpack.c.h.b16 %v1640
    %v1921 = vunpack.c.l.b16 %v1641
    %v1922 = vunpack.c.h.b16 %v1641
    %v1923 = vunpack.c.l.b16 %v1642
    %v1924 = vunpack.c.h.b16 %v1642
    %v1925 = vunpack.c.l.b16 %v1643
    %v1926 = vunpack.c.h.b16 %v1643
    %v1927 = vunpack.c.l.b16 %v1644
    %v1928 = vunpack.c.h.b16 %v1644
    %v1929 = vunpack.c.l.b16 %v1645
    %v1930 = vunpack.c.h.b16 %v1645
    %v1931 = vunpack.c.l.b16 %v1646
    %v1932 = vunpack.c.h.b16 %v1646
    %v1933 = vunpack.c.l.b16 %v1647
    %v1934 = vunpack.c.h.b16 %v1647
    %v1935 = vunpack.c.l.b16 %v1648
    %v1936 = vunpack.c.h.b16 %v1648
    %v1937 = vunpack.c.l.b16 %v1649
    %v1938 = vunpack.c.h.b16 %v1649
    %v1939 = vunpack.c.l.b16 %v1650
    %v1940 = vunpack.c.h.b16 %v1650
    %v1941 = vunpack.c.l.b16 %v1651
    %v1942 = vunpack.c.h.b16 %v1651
    %v1943 = vunpack.c.l.b16 %v1652
    %v1944 = vunpack.c.h.b16 %v1652
    %v1945 = vunpack.c.l.b16 %v1653
    %v1946 = vunpack.c.h.b16 %v1653
    %v1947 = vunpack.c.l.b16 %v1654
    %v1948 = vunpack.c.h.b16 %v1654
    %v1949 = vunpack.c.l.b16 %v1655
    %v1950 = vunpack.c.h.b16 %v1655
    %v1951 = vunpack.c.l.b16 %v1656
    %v1952 = vunpack.c.h.b16 %v1656
    %v1953 = vunpack.c.l.b16 %v1657
    %v1954 = vunpack.c.h.b16 %v1657
    %v1955 = vunpack.c.l.b16 %v1658
    %v1956 = vunpack.c.h.b16 %v1658
    %v1957 = vunpack.c.l.b16 %v1659
    %v1958 = vunpack.c.h.b16 %v1659
    %v1959 = vunpack.c.l.b16 %v1660
    %v1960 = vunpack.c.h.b16 %v1660
    %v1961 = vunpack.c.l.b16 %v1661
    %v1962 = vunpack.c.h.b16 %v1661
    %v1963 = vunpack.c.l.b16 %v1662
    %v1964 = vunpack.c.h.b16 %v1662
    %v1965 = vunpack.c.l.b16 %v1663
    %v1966 = vunpack.c.h.b16 %v1663
    %v1967 = vunpack.c.l.b16 %v1664
    %v1968 = vunpack.c.h.b16 %v1664
    %v1969 = vunpack.c.l.b16 %v1665
    %v1970 = vunpack.c.h.b16 %v1665
    %v1971 = vunpack.c.l.b16 %v1666
    %v1972 = vunpack.c.h.b16 %v1666
    %v1973 = vunpack.c.l.b16 %v1667
    %v1974 = vunpack.c.h.b16 %v1667
    %v1975 = vunpack.c.l.b16 %v1668
    %v1976 = vunpack.c.h.b16 %v1668
    %v1977 = vunpack.c.l.b16 %v1669
    %v1978 = vunpack.c.h.b16 %v1669
    %v1979 = vunpack.c.l.b16 %v1670
    %v1980 = vunpack.c.h.b16 %v1670
    %v1981 = vunpack.c.l.b16 %v1671
    %v1982 = vunpack.c.h.b16 %v1671
    %v1983 = vunpack.c.l.b16 %v1672
    %v1984 = vunpack.c.h.b16 %v1672
    %v1985 = vunpack.c.l.b16 %v1673
    %v1986 = vunpack.c.h.b16 %v1673
    %v1987 = vunpack.c.l.b16 %v1674
    %v1988 = vunpack.c.h.b16 %v1674
    %v1989 = vunpack.c.l.b16 %v1675
    %v1990 = vunpack.c.h.b16 %v1675
    %v1991 = vunpack.c.l.b16 %v1676
    %v1992 = vunpack.c.h.b16 %v1676
    %v1993 = vunpack.c.l.b16 %v1677
    %v1994 = vunpack.c.h.b16 %v1677
    %v1995 = vunpack.c.l.b16 %v1678
    %v1996 = vunpack.c.h.b16 %v1678
    %v1997 = vunpack.c.l.b16 %v1679
    %v1998 = vunpack.c.h.b16 %v1679
    %v1999 = vunpack.c.l.b16 %v1680
    %v2000 = vunpack.c.h.b16 %v1680
    %v2001 = vunpack.c.l.b16 %v1681
    %v2002 = vunpack.c.h.b16 %v1681
    %v2003 = vunpack.c.l.b16 %v1682
    %v2004 = vunpack.c.h.b16 %v1682
    %v2005 = vunpack.c.l.b16 %v1683
    %v2006 = vunpack.c.h.b16 %v1683
    %v2007 = vunpack.c.l.b16 %v1684
    %v2008 = vunpack.c.h.b16 %v1684
    %v2009 = vunpack.c.l.b16 %v1685
    %v2010 = vunpack.c.h.b16 %v1685
    %v2011 = vunpack.c.l.b16 %v1686
    %v2012 = vunpack.c.h.b16 %v1686
    %v2013 = vunpack.c.l.b16 %v1687
    %v2014 = vunpack.c.h.b16 %v1687
    %v2015 = vunpack.c.l.b16 %v1688
    %v2016 = vunpack.c.h.b16 %v1688
    %v2017 = vunpack.c.l.b16 %v1689
    %v2018 = vunpack.c.h.b16 %v1689
    %v2019 = vunpack.c.l.b16 %v1690
    %v2020 = vunpack.c.h.b16 %v1690
    %v2021 = vunpack.c.l.b16 %v1691
    %v2022 = vunpack.c.h.b16 %v1691
    %v2023 = vunpack.c.l.b16 %v1692
    %v2024 = vunpack.c.h.b16 %v1692
    %v2025 = vunpack.c.l.b16 %v1693
    %v2026 = vunpack.c.h.b16 %v1693
    %v2027 = vunpack.c.l.b16 %v1694
    %v2028 = vunpack.c.h.b16 %v1694
    %v2029 = vunpack.c.l.b16 %v1695
    %v2030 = vunpack.c.h.b16 %v1695
    %v2031 = vunpack.c.l.b16 %v1696
    %v2032 = vunpack.c.h.b16 %v1696
    %v2033 = vunpack.c.l.b16 %v1697
    %v2034 = vunpack.c.h.b16 %v1697
    %v2035 = vunpack.c.l.b16 %v1698
    %v2036 = vunpack.c.h.b16 %v1698
    %v2037 = vunpack.c.l.b16 %v1699
    %v2038 = vunpack.c.h.b16 %v1699
    %v2039 = vunpack.c.l.b16 %v1700
    %v2040 = vunpack.c.h.b16 %v1700
    %v2041 = vunpack.c.l.b16 %v1701
    %v2042 = vunpack.c.h.b16 %v1701
    %v2043 = vunpack.c.l.b16 %v1702
    %v2044 = vunpack.c.h.b16 %v1702
    %v2045 = vunpack.c.l.b16 %v1703
    %v2046 = vunpack.c.h.b16 %v1703
    %v2047 = vunpack.c.l.b16 %v1704
    %v2048 = vunpack.c.h.b16 %v1704
    %v2049 = vunpack.c.l.b16 %v1705
    %v2050 = vunpack.c.h.b16 %v1705
    %v2051 = vunpack.c.l.b16 %v1706
    %v2052 = vunpack.c.h.b16 %v1706
    %v2053 = vunpack.c.l.b16 %v1707
    %v2054 = vunpack.c.h.b16 %v1707
    %v2055 = vunpack.c.l.b16 %v1708
    %v2056 = vunpack.c.h.b16 %v1708
    %v2057 = vunpack.c.l.b16 %v1709
    %v2058 = vunpack.c.h.b16 %v1709
    %v2059 = vunpack.c.l.b16 %v1710
    %v2060 = vunpack.c.h.b16 %v1710
    %v2061 = vunpack.c.l.b16 %v1711
    %v2062 = vunpack.c.h.b16 %v1711
    %v2063 = vunpack.c.l.b16 %v1712
    %v2064 = vunpack.c.h.b16 %v1712
    %v2065 = vunpack.c.l.b16 %v1713
    %v2066 = vunpack.c.h.b16 %v1713
    %v2067 = vunpack.c.l.b16 %v1714
    %v2068 = vunpack.c.h.b16 %v1714
    %v2069 = vunpack.c.l.b16 %v1715
    %v2070 = vunpack.c.h.b16 %v1715
    %v2071 = vunpack.c.l.b16 %v1716
    %v2072 = vunpack.c.h.b16 %v1716
    %v2073 = vunpack.c.l.b16 %v1717
    %v2074 = vunpack.c.h.b16 %v1717
    %v2075 = vunpack.c.l.b16 %v1718
    %v2076 = vunpack.c.h.b16 %v1718
    %v2077 = vunpack.c.l.b16 %v1719
    %v2078 = vunpack.c.h.b16 %v1719
    %v2079 = vunpack.c.l.b16 %v1720
    %v2080 = vunpack.c.h.b16 %v1720
    %v2081 = vunpack.c.l.b16 %v1721
    %v2082 = vunpack.c.h.b16 %v1721
    %v2083 = vunpack.c.l.b16 %v1722
    %v2084 = vunpack.c.h.b16 %v1722
    %v2085 = vunpack.c.l.b16 %v1723
    %v2086 = vunpack.c.h.b16 %v1723
    %v2087 = vunpack.c.l.b16 %v1724
    %v2088 = vunpack.c.h.b16 %v1724
    %v2089 = vunpack.c.l.b16 %v1725
    %v2090 = vunpack.c.h.b16 %v1725
    %v2091 = vunpack.c.l.b16 %v1726
    %v2092 = vunpack.c.h.b16 %v1726
    %v2093 = vunpack.c.l.b16 %v1727
    %v2094 = vunpack.c.h.b16 %v1727
    %v2095 = vunpack.c.l.b16 %v1728
    %v2096 = vunpack.c.h.b16 %v1728
    %v2097 = vunpack.c.l.b16 %v1729
    %v2098 = vunpack.c.h.b16 %v1729
    %v2099 = vunpack.c.l.b16 %v1730
    %v2100 = vunpack.c.h.b16 %v1730
    %v2101 = vunpack.c.l.b16 %v1731
    %v2102 = vunpack.c.h.b16 %v1731
    %v2103 = vunpack.c.l.b16 %v1732
    %v2104 = vunpack.c.h.b16 %v1732
    %v2105 = vunpack.c.l.b16 %v1733
    %v2106 = vunpack.c.h.b16 %v1733
    %v2107 = vunpack.c.l.b16 %v1734
    %v2108 = vunpack.c.h.b16 %v1734
    %v2109 = vunpack.c.l.b16 %v1735
    %v2110 = vunpack.c.h.b16 %v1735
    %v2111 = vunpack.c.l.b16 %v1736
    %v2112 = vunpack.c.h.b16 %v1736
    %v2113 = vunpack.c.l.b16 %v1737
    %v2114 = vunpack.c.h.b16 %v1737
    %v2115 = vunpack.c.l.b16 %v1738
    %v2116 = vunpack.c.h.b16 %v1738
    %v2117 = vunpack.c.l.b16 %v1739
    %v2118 = vunpack.c.h.b16 %v1739
    %v2119 = vunpack.c.l.b16 %v1740
    %v2120 = vunpack.c.h.b16 %v1740
    %v2121 = vunpack.c.l.b16 %v1741
    %v2122 = vunpack.c.h.b16 %v1741
    %v2123 = vunpack.c.l.b16 %v1742
    %v2124 = vunpack.c.h.b16 %v1742
    %v2125 = vunpack.c.l.b16 %v1743
    %v2126 = vunpack.c.h.b16 %v1743
    %v2127 = vunpack.c.l.b16 %v1744
    %v2128 = vunpack.c.h.b16 %v1744
    %v2129 = vunpack.c.l.b16 %v1745
    %v2130 = vunpack.c.h.b16 %v1745
    %v2131 = vunpack.c.l.b16 %v1746
    %v2132 = vunpack.c.h.b16 %v1746
    %v2133 = vunpack.c.l.b16 %v1747
    %v2134 = vunpack.c.h.b16 %v1747
    %v2135 = vunpack.c.l.b16 %v1748
    %v2136 = vunpack.c.h.b16 %v1748
    %v2137 = vunpack.c.l.b16 %v1749
    %v2138 = vunpack.c.h.b16 %v1749
    %v2139 = vunpack.c.l.b16 %v1750
    %v2140 = vunpack.c.h.b16 %v1750
    %v2141 = vunpack.c.l.b16 %v1751
    %v2142 = vunpack.c.h.b16 %v1751
    %v2143 = vunpack.c.l.b16 %v1752
    %v2144 = vunpack.c.h.b16 %v1752
    %v2145 = vunpack.c.l.b16 %v1753
    %v2146 = vunpack.c.h.b16 %v1753
    %v2147 = vunpack.c.l.b16 %v1754
    %v2148 = vunpack.c.h.b16 %v1754
    %v2149 = vunpack.c.l.b16 %v1755
    %v2150 = vunpack.c.h.b16 %v1755
    %v2151 = vunpack.c.l.b16 %v1756
    %v2152 = vunpack.c.h.b16 %v1756
    %v2153 = vunpack.c.l.b16 %v1757
    %v2154 = vunpack.c.h.b16 %v1757
    %v2155 = vunpack.c.l.b16 %v1758
    %v2156 = vunpack.c.h.b16 %v1758
    %v2157 = vunpack.c.l.b16 %v1759
    %v2158 = vunpack.c.h.b16 %v1759
    %v2159 = vunpack.c.l.b16 %v1760
    %v2160 = vunpack.c.h.b16 %v1760
    %v2161 = vunpack.c.l.b16 %v1761
    %v2162 = vunpack.c.h.b16 %v1761
    %v2163 = vunpack.c.l.b16 %v1762
    %v2164 = vunpack.c.h.b16 %v1762
    %v2165 = vunpack.c.l.b16 %v1763
    %v2166 = vunpack.c.h.b16 %v1763
    %v2167 = vunpack.c.l.b16 %v1764
    %v2168 = vunpack.c.h.b16 %v1764
    %v2169 = vunpack.c.l.b16 %v1765
    %v2170 = vunpack.c.h.b16 %v1765
    %v2171 = vunpack.c.l.b16 %v1766
    %v2172 = vunpack.c.h.b16 %v1766
    %v2173 = vpack.c.b16 %v1921, %v1917
    %v2174 = vpack.c.b16 %v1922, %v1918
    %v2175 = vpack.c.b16 %v1923, %v1919
    %v2176 = vpack.c.b16 %v1924, %v1920
    %v2177 = vpack.c.b16 %v1929, %v1925
    %v2178 = vpack.c.b16 %v1930, %v1926
    %v2179 = vpack.c.b16 %v1931, %v1927
    %v2180 = vpack.c.b16 %v1932, %v1928
    %v2181 = vpack.c.b16 %v1937, %v1933
    %v2182 = vpack.c.b16 %v1938, %v1934
    %v2183 = vpack.c.b16 %v1939, %v1935
    %v2184 = vpack.c.b16 %v1940, %v1936
    %v2185 = vpack.c.b16 %v1945, %v1941
    %v2186 = vpack.c.b16 %v1946, %v1942
    %v2187 = vpack.c.b16 %v1947, %v1943
    %v2188 = vpack.c.b16 %v1948, %v1944
    %v2189 = vpack.c.b16 %v1953, %v1949
    %v2190 = vpack.c.b16 %v1954, %v1950
    %v2191 = vpack.c.b16 %v1955, %v1951
    %v2192 = vpack.c.b16 %v1956, %v1952
    %v2193 = vpack.c.b16 %v1961, %v1957
    %v2194 = vpack.c.b16 %v1962, %v1958
    %v2195 = vpack.c.b16 %v1963, %v1959
    %v2196 = vpack.c.b16 %v1964, %v1960
    %v2197 = vpack.c.b16 %v1969, %v1965
    %v2198 = vpack.c.b16 %v1970, %v1966
    %v2199 = vpack.c.b16 %v1971, %v1967
    %v2200 = vpack.c.b16 %v1972, %v1968
    %v2201 = vpack.c.b16 %v1977, %v1973
    %v2202 = vpack.c.b16 %v1978, %v1974
    %v2203 = vpack.c.b16 %v1979, %v1975
    %v2204 = vpack.c.b16 %v1980, %v1976
    %v2205 = vpack.c.b16 %v1985, %v1981
    %v2206 = vpack.c.b16 %v1986, %v1982
    %v2207 = vpack.c.b16 %v1987, %v1983
    %v2208 = vpack.c.b16 %v1988, %v1984
    %v2209 = vpack.c.b16 %v1993, %v1989
    %v2210 = vpack.c.b16 %v1994, %v1990
    %v2211 = vpack.c.b16 %v1995, %v1991
    %v2212 = vpack.c.b16 %v1996, %v1992
    %v2213 = vpack.c.b16 %v2001, %v1997
    %v2214 = vpack.c.b16 %v2002, %v1998
    %v2215 = vpack.c.b16 %v2003, %v1999
    %v2216 = vpack.c.b16 %v2004, %v2000
    %v2217 = vpack.c.b16 %v2009, %v2005
    %v2218 = vpack.c.b16 %v2010, %v2006
    %v2219 = vpack.c.b16 %v2011, %v2007
    %v2220 = vpack.c.b16 %v2012, %v2008
    %v2221 = vpack.c.b16 %v2017, %v2013
    %v2222 = vpack.c.b16 %v2018, %v2014
    %v2223 = vpack.c.b16 %v2019, %v2015
    %v2224 = vpack.c.b16 %v2020, %v2016
    %v2225 = vpack.c.b16 %v2025, %v2021
    %v2226 = vpack.c.b16 %v2026, %v2022
    %v2227 = vpack.c.b16 %v2027, %v2023
    %v2228 = vpack.c.b16 %v2028, %v2024
    %v2229 = vpack.c.b16 %v2033, %v2029
    %v2230 = vpack.c.b16 %v2034, %v2030
    %v2231 = vpack.c.b16 %v2035, %v2031
    %v2232 = vpack.c.b16 %v2036, %v2032
    %v2233 = vpack.c.b16 %v2041, %v2037
    %v2234 = vpack.c.b16 %v2042, %v2038
    %v2235 = vpack.c.b16 %v2043, %v2039
    %v2236 = vpack.c.b16 %v2044, %v2040
    %v2237 = vpack.c.b16 %v2049, %v2045
    %v2238 = vpack.c.b16 %v2050, %v2046
    %v2239 = vpack.c.b16 %v2051, %v2047
    %v2240 = vpack.c.b16 %v2052, %v2048
    %v2241 = vpack.c.b16 %v2057, %v2053
    %v2242 = vpack.c.b16 %v2058, %v2054
    %v2243 = vpack.c.b16 %v2059, %v2055
    %v2244 = vpack.c.b16 %v2060, %v2056
    %v2245 = vpack.c.b16 %v2065, %v2061
    %v2246 = vpack.c.b16 %v2066, %v2062
    %v2247 = vpack.c.b16 %v2067, %v2063
    %v2248 = vpack.c.b16 %v2068, %v2064
    %v2249 = vpack.c.b16 %v2073, %v2069
    %v2250 = vpack.c.b16 %v2074, %v2070
    %v2251 = vpack.c.b16 %v2075, %v2071
    %v2252 = vpack.c.b16 %v2076, %v2072
    %v2253 = vpack.c.b16 %v2081, %v2077
    %v2254 = vpack.c.b16 %v2082, %v2078
    %v2255 = vpack.c.b16 %v2083, %v2079
    %v2256 = vpack.c.b16 %v2084, %v2080
    %v2257 = vpack.c.b16 %v2089, %v2085
    %v2258 = vpack.c.b16 %v2090, %v2086
    %v2259 = vpack.c.b16 %v2091, %v2087
    %v2260 = vpack.c.b16 %v2092, %v2088
    %v2261 = vpack.c.b16 %v2097, %v2093
    %v2262 = vpack.c.b16 %v2098, %v2094
    %v2263 = vpack.c.b16 %v2099, %v2095
    %v2264 = vpack.c.b16 %v2100, %v2096
    %v2265 = vpack.c.b16 %v2105, %v2101
    %v2266 = vpack.c.b16 %v2106, %v2102
    %v2267 = vpack.c.b16 %v2107, %v2103
    %v2268 = vpack.c.b16 %v2108, %v2104
    %v2269 = vpack.c.b16 %v2113, %v2109
    %v2270 = vpack.c.b16 %v2114, %v2110
    %v2271 = vpack.c.b16 %v2115, %v2111
    %v2272 = vpack.c.b16 %v2116, %v2112
    %v2273 = vpack.c.b16 %v2121, %v2117
    %v2274 = vpack.c.b16 %v2122, %v2118
    %v2275 = vpack.c.b16 %v2123, %v2119
    %v2276 = vpack.c.b16 %v2124, %v2120
    %v2277 = vpack.c.b16 %v2129, %v2125
    %v2278 = vpack.c.b16 %v2130, %v2126
    %v2279 = vpack.c.b16 %v2131, %v2127
    %v2280 = vpack.c.b16 %v2132, %v2128
    %v2281 = vpack.c.b16 %v2137, %v2133
    %v2282 = vpack.c.b16 %v2138, %v2134
    %v2283 = vpack.c.b16 %v2139, %v2135
    %v2284 = vpack.c.b16 %v2140, %v2136
    %v2285 = vpack.c.b16 %v2145, %v2141
    %v2286 = vpack.c.b16 %v2146, %v2142
    %v2287 = vpack.c.b16 %v2147, %v2143
    %v2288 = vpack.c.b16 %v2148, %v2144
    %v2289 = vpack.c.b16 %v2153, %v2149
    %v2290 = vpack.c.b16 %v2154, %v2150
    %v2291 = vpack.c.b16 %v2155, %v2151
    %v2292 = vpack.c.b16 %v2156, %v2152
    %v2293 = vpack.c.b16 %v2161, %v2157
    %v2294 = vpack.c.b16 %v2162, %v2158
    %v2295 = vpack.c.b16 %v2163, %v2159
    %v2296 = vpack.c.b16 %v2164, %v2160
    %v2297 = vpack.c.b16 %v2169, %v2165
    %v2298 = vpack.c.b16 %v2170, %v2166
    %v2299 = vpack.c.b16 %v2171, %v2167
    %v2300 = vpack.c.b16 %v2172, %v2168
    %2429 = vmatprep.subr.bf16.mxu0 %v2174
    %2430 = vmatpush1.bf16.msra.mxu0 %v2173
    %2431 = vmatprep.subr.bf16.mxu0 %v2178
    %2432 = vmatpush1.bf16.msra.mxu0 %v2177
    %2433 = vmatprep.subr.bf16.mxu0 %v2182
    %2434 = vmatpush1.bf16.msra.mxu0 %v2181
    %2435 = vmatprep.subr.bf16.mxu0 %v2186
    %2436 = vmatpush1.bf16.msra.mxu0 %v2185
    %2437 = vmatprep.subr.bf16.mxu0 %v2190
    %2438 = vmatpush1.bf16.msra.mxu0 %v2189
    %2439 = vmatprep.subr.bf16.mxu0 %v2194
    %2440 = vmatpush1.bf16.msra.mxu0 %v2193
    %2441 = vmatprep.subr.bf16.mxu0 %v2198
    %2442 = vmatpush1.bf16.msra.mxu0 %v2197
    %2443 = vmatprep.subr.bf16.mxu0 %v2202
    %2444 = vmatpush1.bf16.msra.mxu0 %v2201
    %2445 = vmatprep.subr.bf16.mxu0 %v2206
    %2446 = vmatpush1.bf16.msra.mxu0 %v2205
    %2447 = vmatprep.subr.bf16.mxu0 %v2210
    %2448 = vmatpush1.bf16.msra.mxu0 %v2209
    %2449 = vmatprep.subr.bf16.mxu0 %v2214
    %2450 = vmatpush1.bf16.msra.mxu0 %v2213
    %2451 = vmatprep.subr.bf16.mxu0 %v2218
    %2452 = vmatpush1.bf16.msra.mxu0 %v2217
    %2453 = vmatprep.subr.bf16.mxu0 %v2222
    %2454 = vmatpush1.bf16.msra.mxu0 %v2221
    %2455 = vmatprep.subr.bf16.mxu0 %v2226
    %2456 = vmatpush1.bf16.msra.mxu0 %v2225
    %2457 = vmatprep.subr.bf16.mxu0 %v2230
    %2458 = vmatpush1.bf16.msra.mxu0 %v2229
    %2459 = vmatprep.subr.bf16.mxu0 %v2234
    %2460 = vmatpush1.bf16.msra.mxu0 %v2233
    %2461 = vmatprep.mubr.bf16.mxu0 %v1636
    %2462 = vmatmul.mubr.bf16.gmra.mrb[0].mxu0 %v1635
    %v2463 = vpop.f32.mrb[0].mxu0
    %v2464 = vadd.f32 %v1772, %v2463
    %v2465 = vpop.f32.mrb[0].mxu0
    %v2466 = vadd.f32 %v1776, %v2465
    %v2467 = vpop.f32.mrb[0].mxu0
    %v2468 = vpop.f32.mrb[0].mxu0
    %2469 = vdwg.mxu0
    %2470 = vmatprep.subr.bf16.mxu0 %v2238
    %2471 = vmatpush1.bf16.msra.mxu0 %v2237
    %2472 = vmatprep.subr.bf16.mxu0 %v2242
    %2473 = vmatpush1.bf16.msra.mxu0 %v2241
    %2474 = vmatprep.subr.bf16.mxu0 %v2246
    %2475 = vmatpush1.bf16.msra.mxu0 %v2245
    %2476 = vmatprep.subr.bf16.mxu0 %v2250
    %2477 = vmatpush1.bf16.msra.mxu0 %v2249
    %2478 = vmatprep.subr.bf16.mxu0 %v2254
    %2479 = vmatpush1.bf16.msra.mxu0 %v2253
    %2480 = vmatprep.subr.bf16.mxu0 %v2258
    %2481 = vmatpush1.bf16.msra.mxu0 %v2257
    %2482 = vmatprep.subr.bf16.mxu0 %v2262
    %2483 = vmatpush1.bf16.msra.mxu0 %v2261
    %2484 = vmatprep.subr.bf16.mxu0 %v2266
    %2485 = vmatpush1.bf16.msra.mxu0 %v2265
    %2486 = vmatprep.subr.bf16.mxu0 %v2270
    %2487 = vmatpush1.bf16.msra.mxu0 %v2269
    %2488 = vmatprep.subr.bf16.mxu0 %v2274
    %2489 = vmatpush1.bf16.msra.mxu0 %v2273
    %2490 = vmatprep.subr.bf16.mxu0 %v2278
    %2491 = vmatpush1.bf16.msra.mxu0 %v2277
    %2492 = vmatprep.subr.bf16.mxu0 %v2282
    %2493 = vmatpush1.bf16.msra.mxu0 %v2281
    %2494 = vmatprep.subr.bf16.mxu0 %v2286
    %2495 = vmatpush1.bf16.msra.mxu0 %v2285
    %2496 = vmatprep.subr.bf16.mxu0 %v2290
    %2497 = vmatpush1.bf16.msra.mxu0 %v2289
    %2498 = vmatprep.subr.bf16.mxu0 %v2294
    %2499 = vmatpush1.bf16.msra.mxu0 %v2293
    %2500 = vmatprep.subr.bf16.mxu0 %v2298
    %2501 = vmatpush1.bf16.msra.mxu0 %v2297
    %2502 = vmatprep.mubr.bf16.mxu0 %v1638
    %2503 = vmatmul.mubr.bf16.gmra.mrb[0].mxu0 %v1637
    %v2504 = vpop.f32.mrb[0].mxu0
    %v2505 = vadd.f32 %v2464, %v2504
    %v2506 = vpop.f32.mrb[0].mxu0
    %v2507 = vadd.f32 %v2466, %v2506
    %v2508 = vpop.f32.mrb[0].mxu0
    %v2509 = vpop.f32.mrb[0].mxu0
    %2510 = vdwg.mxu0
    %2511 = vmatprep.subr.bf16.mxu0 %v2176
    %2512 = vmatpush1.bf16.msra.mxu0 %v2175
    %2513 = vmatprep.subr.bf16.mxu0 %v2180
    %2514 = vmatpush1.bf16.msra.mxu0 %v2179
    %2515 = vmatprep.subr.bf16.mxu0 %v2184
    %2516 = vmatpush1.bf16.msra.mxu0 %v2183
    %2517 = vmatprep.subr.bf16.mxu0 %v2188
    %2518 = vmatpush1.bf16.msra.mxu0 %v2187
    %2519 = vmatprep.subr.bf16.mxu0 %v2192
    %2520 = vmatpush1.bf16.msra.mxu0 %v2191
    %2521 = vmatprep.subr.bf16.mxu0 %v2196
    %2522 = vmatpush1.bf16.msra.mxu0 %v2195
    %2523 = vmatprep.subr.bf16.mxu0 %v2200
    %2524 = vmatpush1.bf16.msra.mxu0 %v2199
    %2525 = vmatprep.subr.bf16.mxu0 %v2204
    %2526 = vmatpush1.bf16.msra.mxu0 %v2203
    %2527 = vmatprep.subr.bf16.mxu0 %v2208
    %2528 = vmatpush1.bf16.msra.mxu0 %v2207
    %2529 = vmatprep.subr.bf16.mxu0 %v2212
    %2530 = vmatpush1.bf16.msra.mxu0 %v2211
    %2531 = vmatprep.subr.bf16.mxu0 %v2216
    %2532 = vmatpush1.bf16.msra.mxu0 %v2215
    %2533 = vmatprep.subr.bf16.mxu0 %v2220
    %2534 = vmatpush1.bf16.msra.mxu0 %v2219
    %2535 = vmatprep.subr.bf16.mxu0 %v2224
    %2536 = vmatpush1.bf16.msra.mxu0 %v2223
    %2537 = vmatprep.subr.bf16.mxu0 %v2228
    %2538 = vmatpush1.bf16.msra.mxu0 %v2227
    %2539 = vmatprep.subr.bf16.mxu0 %v2232
    %2540 = vmatpush1.bf16.msra.mxu0 %v2231
    %2541 = vmatprep.subr.bf16.mxu0 %v2236
    %2542 = vmatpush1.bf16.msra.mxu0 %v2235
    %2543 = vmatprep.mubr.bf16.mxu0 %v1636
    %2544 = vmatmul.mubr.bf16.gmra.mrb[0].mxu0 %v1635
    %v2545 = vpop.f32.mrb[0].mxu0
    %v2546 = vadd.f32 %v1780, %v2545
    %v2547 = vpop.f32.mrb[0].mxu0
    %v2548 = vadd.f32 %v1784, %v2547
    %v2549 = vpop.f32.mrb[0].mxu0
    %v2550 = vpop.f32.mrb[0].mxu0
    %2551 = vdwg.mxu0
    %2552 = vmatprep.subr.bf16.mxu0 %v2240
    %2553 = vmatpush1.bf16.msra.mxu0 %v2239
    %2554 = vmatprep.subr.bf16.mxu0 %v2244
    %2555 = vmatpush1.bf16.msra.mxu0 %v2243
    %2556 = vmatprep.subr.bf16.mxu0 %v2248
    %2557 = vmatpush1.bf16.msra.mxu0 %v2247
    %2558 = vmatprep.subr.bf16.mxu0 %v2252
    %2559 = vmatpush1.bf16.msra.mxu0 %v2251
    %2560 = vmatprep.subr.bf16.mxu0 %v2256
    %2561 = vmatpush1.bf16.msra.mxu0 %v2255
    %2562 = vmatprep.subr.bf16.mxu0 %v2260
    %2563 = vmatpush1.bf16.msra.mxu0 %v2259
    %2564 = vmatprep.subr.bf16.mxu0 %v2264
    %2565 = vmatpush1.bf16.msra.mxu0 %v2263
    %2566 = vmatprep.subr.bf16.mxu0 %v2268
    %2567 = vmatpush1.bf16.msra.mxu0 %v2267
    %2568 = vmatprep.subr.bf16.mxu0 %v2272
    %2569 = vmatpush1.bf16.msra.mxu0 %v2271
    %2570 = vmatprep.subr.bf16.mxu0 %v2276
    %2571 = vmatpush1.bf16.msra.mxu0 %v2275
    %2572 = vmatprep.subr.bf16.mxu0 %v2280
    %2573 = vmatpush1.bf16.msra.mxu0 %v2279
    %2574 = vmatprep.subr.bf16.mxu0 %v2284
    %2575 = vmatpush1.bf16.msra.mxu0 %v2283
    %2576 = vmatprep.subr.bf16.mxu0 %v2288
    %2577 = vmatpush1.bf16.msra.mxu0 %v2287
    %2578 = vmatprep.subr.bf16.mxu0 %v2292
    %2579 = vmatpush1.bf16.msra.mxu0 %v2291
    %2580 = vmatprep.subr.bf16.mxu0 %v2296
    %2581 = vmatpush1.bf16.msra.mxu0 %v2295
    %2582 = vmatprep.subr.bf16.mxu0 %v2300
    %2583 = vmatpush1.bf16.msra.mxu0 %v2299
    %2584 = vmatprep.mubr.bf16.mxu0 %v1638
    %2585 = vmatmul.mubr.bf16.gmra.mrb[0].mxu0 %v1637
    %v2586 = vpop.f32.mrb[0].mxu0
    %v2587 = vadd.f32 %v2546, %v2586
    %v2588 = vpop.f32.mrb[0].mxu0
    %v2589 = vadd.f32 %v2548, %v2588
    %v2590 = vpop.f32.mrb[0].mxu0
    %v2591 = vpop.f32.mrb[0].mxu0
    %2592 = vdwg.mxu0
    %v2593 = vmax.f32 %v2505, 0.0
    %v2594 = vmax.f32 %v2507, 0.0
    %v2595 = vmax.f32 %v2587, 0.0
    %v2596 = vmax.f32 %v2589, 0.0
    %v2597 = vpack.c.bf16 %v2593, %v2593
    %v2598 = vpack.c.bf16 %v2594, %v2594
    %v2599 = vpack.c.bf16 %v2595, %v2595
    %v2600 = vpack.c.bf16 %v2596, %v2596
    %v2601 = vld [vmem:[#allocation8] sm:$0xf]
    %v2602 = vld [vmem:[#allocation8 + $0x4] sm:$0xf]
    %v2603 = vld [vmem:[#allocation8 + $0x8] sm:$0xf]
    %v2604 = vld [vmem:[#allocation8 + $0xc] sm:$0xf]
    %v2605 = vld [vmem:[#allocation8 + $0x10] sm:$0xf]
    %v2606 = vld [vmem:[#allocation8 + $0x14] sm:$0xf]
    %v2607 = vld [vmem:[#allocation8 + $0x18] sm:$0xf]
    %v2608 = vld [vmem:[#allocation8 + $0x1c] sm:$0xf]
    %v2609 = vld [vmem:[#allocation8 + $0x20] sm:$0xf]
    %v2610 = vld [vmem:[#allocation8 + $0x24] sm:$0xf]
    %v2611 = vld [vmem:[#allocation8 + $0x28] sm:$0xf]
    %v2612 = vld [vmem:[#allocation8 + $0x2c] sm:$0xf]
    %v2613 = vld [vmem:[#allocation8 + $0x30] sm:$0xf]
    %v2614 = vld [vmem:[#allocation8 + $0x34] sm:$0xf]
    %v2615 = vld [vmem:[#allocation8 + $0x38] sm:$0xf]
    %v2616 = vld [vmem:[#allocation8 + $0x3c] sm:$0xf]
    %v2617 = vld [vmem:[#allocation8 + $0x40] sm:$0xf]
    %v2618 = vld [vmem:[#allocation8 + $0x44] sm:$0xf]
    %v2619 = vld [vmem:[#allocation8 + $0x48] sm:$0xf]
    %v2620 = vld [vmem:[#allocation8 + $0x4c] sm:$0xf]
    %v2621 = vld [vmem:[#allocation8 + $0x50] sm:$0xf]
    %v2622 = vld [vmem:[#allocation8 + $0x54] sm:$0xf]
    %v2623 = vld [vmem:[#allocation8 + $0x58] sm:$0xf]
    %v2624 = vld [vmem:[#allocation8 + $0x5c] sm:$0xf]
    %v2625 = vld [vmem:[#allocation8 + $0x60] sm:$0xf]
    %v2626 = vld [vmem:[#allocation8 + $0x64] sm:$0xf]
    %v2627 = vld [vmem:[#allocation8 + $0x68] sm:$0xf]
    %v2628 = vld [vmem:[#allocation8 + $0x6c] sm:$0xf]
    %v2629 = vld [vmem:[#allocation8 + $0x70] sm:$0xf]
    %v2630 = vld [vmem:[#allocation8 + $0x74] sm:$0xf]
    %v2631 = vld [vmem:[#allocation8 + $0x78] sm:$0xf]
    %v2632 = vld [vmem:[#allocation8 + $0x7c] sm:$0xf]
    %v2633 = vld [vmem:[#allocation8 + $0x80] sm:$0xf]
    %v2634 = vld [vmem:[#allocation8 + $0x84] sm:$0xf]
    %v2635 = vld [vmem:[#allocation8 + $0x88] sm:$0xf]
    %v2636 = vld [vmem:[#allocation8 + $0x8c] sm:$0xf]
    %v2637 = vld [vmem:[#allocation8 + $0x90] sm:$0xf]
    %v2638 = vld [vmem:[#allocation8 + $0x94] sm:$0xf]
    %v2639 = vld [vmem:[#allocation8 + $0x98] sm:$0xf]
    %v2640 = vld [vmem:[#allocation8 + $0x9c] sm:$0xf]
    %v2641 = vld [vmem:[#allocation8 + $0xa0] sm:$0xf]
    %v2642 = vld [vmem:[#allocation8 + $0xa4] sm:$0xf]
    %v2643 = vld [vmem:[#allocation8 + $0xa8] sm:$0xf]
    %v2644 = vld [vmem:[#allocation8 + $0xac] sm:$0xf]
    %v2645 = vld [vmem:[#allocation8 + $0xb0] sm:$0xf]
    %v2646 = vld [vmem:[#allocation8 + $0xb4] sm:$0xf]
    %v2647 = vld [vmem:[#allocation8 + $0xb8] sm:$0xf]
    %v2648 = vld [vmem:[#allocation8 + $0xbc] sm:$0xf]
    %v2649 = vld [vmem:[#allocation8 + $0xc0] sm:$0xf]
    %v2650 = vld [vmem:[#allocation8 + $0xc4] sm:$0xf]
    %v2651 = vld [vmem:[#allocation8 + $0xc8] sm:$0xf]
    %v2652 = vld [vmem:[#allocation8 + $0xcc] sm:$0xf]
    %v2653 = vld [vmem:[#allocation8 + $0xd0] sm:$0xf]
    %v2654 = vld [vmem:[#allocation8 + $0xd4] sm:$0xf]
    %v2655 = vld [vmem:[#allocation8 + $0xd8] sm:$0xf]
    %v2656 = vld [vmem:[#allocation8 + $0xdc] sm:$0xf]
    %v2657 = vld [vmem:[#allocation8 + $0xe0] sm:$0xf]
    %v2658 = vld [vmem:[#allocation8 + $0xe4] sm:$0xf]
    %v2659 = vld [vmem:[#allocation8 + $0xe8] sm:$0xf]
    %v2660 = vld [vmem:[#allocation8 + $0xec] sm:$0xf]
    %v2661 = vld [vmem:[#allocation8 + $0xf0] sm:$0xf]
    %v2662 = vld [vmem:[#allocation8 + $0xf4] sm:$0xf]
    %v2663 = vld [vmem:[#allocation8 + $0xf8] sm:$0xf]
    %v2664 = vld [vmem:[#allocation8 + $0xfc] sm:$0xf]
    %v2665 = vld [vmem:[%s6] sm:$0x1]
    %v2667 = vlaneseq
    %v2668 = vshrl.u32 %v2667, 7
    %v2669 = vsub.s32 0, %v2668
    %v2670 = vrot.slane %v2665, %v2669
    %v2736 = vunpack.c.l.b16 %v2601
    %v2737 = vunpack.c.l.b16 %v2602
    %v2738 = vunpack.c.l.b16 %v2603
    %v2739 = vunpack.c.l.b16 %v2604
    %v2740 = vunpack.c.l.b16 %v2605
    %v2741 = vunpack.c.l.b16 %v2606
    %v2742 = vunpack.c.l.b16 %v2607
    %v2743 = vunpack.c.l.b16 %v2608
    %v2744 = vunpack.c.l.b16 %v2609
    %v2745 = vunpack.c.l.b16 %v2610
    %v2746 = vunpack.c.l.b16 %v2611
    %v2747 = vunpack.c.l.b16 %v2612
    %v2748 = vunpack.c.l.b16 %v2613
    %v2749 = vunpack.c.l.b16 %v2614
    %v2750 = vunpack.c.l.b16 %v2615
    %v2751 = vunpack.c.l.b16 %v2616
    %v2752 = vunpack.c.l.b16 %v2617
    %v2753 = vunpack.c.l.b16 %v2618
    %v2754 = vunpack.c.l.b16 %v2619
    %v2755 = vunpack.c.l.b16 %v2620
    %v2756 = vunpack.c.l.b16 %v2621
    %v2757 = vunpack.c.l.b16 %v2622
    %v2758 = vunpack.c.l.b16 %v2623
    %v2759 = vunpack.c.l.b16 %v2624
    %v2760 = vunpack.c.l.b16 %v2625
    %v2761 = vunpack.c.l.b16 %v2626
    %v2762 = vunpack.c.l.b16 %v2627
    %v2763 = vunpack.c.l.b16 %v2628
    %v2764 = vunpack.c.l.b16 %v2629
    %v2765 = vunpack.c.l.b16 %v2630
    %v2766 = vunpack.c.l.b16 %v2631
    %v2767 = vunpack.c.l.b16 %v2632
    %v2768 = vunpack.c.l.b16 %v2633
    %v2769 = vunpack.c.l.b16 %v2634
    %v2770 = vunpack.c.l.b16 %v2635
    %v2771 = vunpack.c.l.b16 %v2636
    %v2772 = vunpack.c.l.b16 %v2637
    %v2773 = vunpack.c.l.b16 %v2638
    %v2774 = vunpack.c.l.b16 %v2639
    %v2775 = vunpack.c.l.b16 %v2640
    %v2776 = vunpack.c.l.b16 %v2641
    %v2777 = vunpack.c.l.b16 %v2642
    %v2778 = vunpack.c.l.b16 %v2643
    %v2779 = vunpack.c.l.b16 %v2644
    %v2780 = vunpack.c.l.b16 %v2645
    %v2781 = vunpack.c.l.b16 %v2646
    %v2782 = vunpack.c.l.b16 %v2647
    %v2783 = vunpack.c.l.b16 %v2648
    %v2784 = vunpack.c.l.b16 %v2649
    %v2785 = vunpack.c.l.b16 %v2650
    %v2786 = vunpack.c.l.b16 %v2651
    %v2787 = vunpack.c.l.b16 %v2652
    %v2788 = vunpack.c.l.b16 %v2653
    %v2789 = vunpack.c.l.b16 %v2654
    %v2790 = vunpack.c.l.b16 %v2655
    %v2791 = vunpack.c.l.b16 %v2656
    %v2792 = vunpack.c.l.b16 %v2657
    %v2793 = vunpack.c.l.b16 %v2658
    %v2794 = vunpack.c.l.b16 %v2659
    %v2795 = vunpack.c.l.b16 %v2660
    %v2796 = vunpack.c.l.b16 %v2661
    %v2797 = vunpack.c.l.b16 %v2662
    %v2798 = vunpack.c.l.b16 %v2663
    %v2799 = vunpack.c.l.b16 %v2664
    %v2800 = vpack.c.b16 %v2737, %v2736
    %v2801 = vpack.c.b16 %v2739, %v2738
    %v2802 = vpack.c.b16 %v2741, %v2740
    %v2803 = vpack.c.b16 %v2743, %v2742
    %v2804 = vpack.c.b16 %v2745, %v2744
    %v2805 = vpack.c.b16 %v2747, %v2746
    %v2806 = vpack.c.b16 %v2749, %v2748
    %v2807 = vpack.c.b16 %v2751, %v2750
    %v2808 = vpack.c.b16 %v2753, %v2752
    %v2809 = vpack.c.b16 %v2755, %v2754
    %v2810 = vpack.c.b16 %v2757, %v2756
    %v2811 = vpack.c.b16 %v2759, %v2758
    %v2812 = vpack.c.b16 %v2761, %v2760
    %v2813 = vpack.c.b16 %v2763, %v2762
    %v2814 = vpack.c.b16 %v2765, %v2764
    %v2815 = vpack.c.b16 %v2767, %v2766
    %v2816 = vpack.c.b16 %v2769, %v2768
    %v2817 = vpack.c.b16 %v2771, %v2770
    %v2818 = vpack.c.b16 %v2773, %v2772
    %v2819 = vpack.c.b16 %v2775, %v2774
    %v2820 = vpack.c.b16 %v2777, %v2776
    %v2821 = vpack.c.b16 %v2779, %v2778
    %v2822 = vpack.c.b16 %v2781, %v2780
    %v2823 = vpack.c.b16 %v2783, %v2782
    %v2824 = vpack.c.b16 %v2785, %v2784
    %v2825 = vpack.c.b16 %v2787, %v2786
    %v2826 = vpack.c.b16 %v2789, %v2788
    %v2827 = vpack.c.b16 %v2791, %v2790
    %v2828 = vpack.c.b16 %v2793, %v2792
    %v2829 = vpack.c.b16 %v2795, %v2794
    %v2830 = vpack.c.b16 %v2797, %v2796
    %v2831 = vpack.c.b16 %v2799, %v2798
    %2864 = vmatprep.subr.bf16.mxu0 0
    %2865 = vmatpush1.bf16.msra.mxu0 %v2800
    %2866 = vmatprep.subr.bf16.mxu0 0
    %2867 = vmatpush1.bf16.msra.mxu0 %v2801
    %2868 = vmatprep.subr.bf16.mxu0 0
    %2869 = vmatpush1.bf16.msra.mxu0 %v2802
    %2870 = vmatprep.subr.bf16.mxu0 0
    %2871 = vmatpush1.bf16.msra.mxu0 %v2803
    %2872 = vmatprep.subr.bf16.mxu0 0
    %2873 = vmatpush1.bf16.msra.mxu0 %v2804
    %2874 = vmatprep.subr.bf16.mxu0 0
    %2875 = vmatpush1.bf16.msra.mxu0 %v2805
    %2876 = vmatprep.subr.bf16.mxu0 0
    %2877 = vmatpush1.bf16.msra.mxu0 %v2806
    %2878 = vmatprep.subr.bf16.mxu0 0
    %2879 = vmatpush1.bf16.msra.mxu0 %v2807
    %2880 = vmatprep.subr.bf16.mxu0 0
    %2881 = vmatpush1.bf16.msra.mxu0 %v2808
    %2882 = vmatprep.subr.bf16.mxu0 0
    %2883 = vmatpush1.bf16.msra.mxu0 %v2809
    %2884 = vmatprep.subr.bf16.mxu0 0
    %2885 = vmatpush1.bf16.msra.mxu0 %v2810
    %2886 = vmatprep.subr.bf16.mxu0 0
    %2887 = vmatpush1.bf16.msra.mxu0 %v2811
    %2888 = vmatprep.subr.bf16.mxu0 0
    %2889 = vmatpush1.bf16.msra.mxu0 %v2812
    %2890 = vmatprep.subr.bf16.mxu0 0
    %2891 = vmatpush1.bf16.msra.mxu0 %v2813
    %2892 = vmatprep.subr.bf16.mxu0 0
    %2893 = vmatpush1.bf16.msra.mxu0 %v2814
    %2894 = vmatprep.subr.bf16.mxu0 0
    %2895 = vmatpush1.bf16.msra.mxu0 %v2815
    %2896 = vmatprep.mubr.bf16.mxu0 %v2598
    %2897 = vmatmul.mubr.bf16.gmra.mrb[0].mxu0 %v2597
    %v2898 = vpop.f32.mrb[0].mxu0
    %v2899 = vadd.f32 %v2670, %v2898
    %v2900 = vpop.f32.mrb[0].mxu0
    %v2901 = vpop.f32.mrb[0].mxu0
    %v2902 = vpop.f32.mrb[0].mxu0
    %2903 = vdwg.mxu0
    %2904 = vmatprep.subr.bf16.mxu0 0
    %2905 = vmatpush1.bf16.msra.mxu0 %v2816
    %2906 = vmatprep.subr.bf16.mxu0 0
    %2907 = vmatpush1.bf16.msra.mxu0 %v2817
    %2908 = vmatprep.subr.bf16.mxu0 0
    %2909 = vmatpush1.bf16.msra.mxu0 %v2818
    %2910 = vmatprep.subr.bf16.mxu0 0
    %2911 = vmatpush1.bf16.msra.mxu0 %v2819
    %2912 = vmatprep.subr.bf16.mxu0 0
    %2913 = vmatpush1.bf16.msra.mxu0 %v2820
    %2914 = vmatprep.subr.bf16.mxu0 0
    %2915 = vmatpush1.bf16.msra.mxu0 %v2821
    %2916 = vmatprep.subr.bf16.mxu0 0
    %2917 = vmatpush1.bf16.msra.mxu0 %v2822
    %2918 = vmatprep.subr.bf16.mxu0 0
    %2919 = vmatpush1.bf16.msra.mxu0 %v2823
    %2920 = vmatprep.subr.bf16.mxu0 0
    %2921 = vmatpush1.bf16.msra.mxu0 %v2824
    %2922 = vmatprep.subr.bf16.mxu0 0
    %2923 = vmatpush1.bf16.msra.mxu0 %v2825
    %2924 = vmatprep.subr.bf16.mxu0 0
    %2925 = vmatpush1.bf16.msra.mxu0 %v2826
    %2926 = vmatprep.subr.bf16.mxu0 0
    %2927 = vmatpush1.bf16.msra.mxu0 %v2827
    %2928 = vmatprep.subr.bf16.mxu0 0
    %2929 = vmatpush1.bf16.msra.mxu0 %v2828
    %2930 = vmatprep.subr.bf16.mxu0 0
    %2931 = vmatpush1.bf16.msra.mxu0 %v2829
    %2932 = vmatprep.subr.bf16.mxu0 0
    %2933 = vmatpush1.bf16.msra.mxu0 %v2830
    %2934 = vmatprep.subr.bf16.mxu0 0
    %2935 = vmatpush1.bf16.msra.mxu0 %v2831
    %2936 = vmatprep.mubr.bf16.mxu0 %v2600
    %2937 = vmatmul.mubr.bf16.gmra.mrb[0].mxu0 %v2599
    %v2938 = vpop.f32.mrb[0].mxu0
    %v2939 = vadd.f32 %v2899, %v2938
    %v2940 = vpop.f32.mrb[0].mxu0
    %v2941 = vpop.f32.mrb[0].mxu0
    %v2942 = vpop.f32.mrb[0].mxu0
    %2943 = vdwg.mxu0
    %v2944 = vpack.c.bf16 %v2939, %v2939
    %2945 = vst [vmem:[#allocation10] sm:$0x3] %v2944
    // Predicated region
    $region46: #{tpu_custom_call.1} parent=1 // pred_check
      _
    $region47: #{tpu_custom_call.1} parent=1 // pred_check_branch
      %2947 = sbr.rel (0) target = $region49
    $region48: #{tpu_custom_call.1} parent=1 // pred_region
      %s2949 = ssub.s32 32, 32
      %2950 = vsyncadd [#allocation4], %s2949
      %s2952 = sshll.u32 [#allocation10], 4
      %s2953 = int_to_ptr.vmem [resolvable:$true] %s2952
      %2955 = dma.vmem_to_hbm [thread:$0]  %s2953, 32, %s7, [#allocation4]
    $region49: #{tpu_custom_call.1} parent=1 // pred_fallthru
      _
    // Predicated region
    $region50: #{tpu_custom_call.1} parent=1 // pred_check
      _
    $region51: #{tpu_custom_call.1} parent=1 // pred_check_branch
      %2957 = sbr.rel (0) target = $region53
    $region52: #{tpu_custom_call.1} parent=1 // pred_region
      %2958 = dma.done [#allocation4], 32
    $region53: #{tpu_custom_call.1} parent=1 // pred_fallthru
      _
    %2959 = vsyncpa [#allocation3], 1
    %2960 = vsyncpa [#allocation6], 1
    %2961 = vsyncpa [#allocation9], 1
    %2962 = vsyncpa [#allocation4], 1

</llo_original>
